<compile_context>
chip_gen: v7x
topology: tpu7x:2x2x1
jax: 0.10.0
libtpu: 0.0.40
codegen_flags: <defaults>
</compile_context>

<pallas_src>
import math

import jax
import jax.numpy as jnp
from jax.experimental import pallas as pl
from jax.experimental.pallas import tpu as pltpu


# ----------------------------------------------------------------------------
# Synthetic SAM configuration
# ----------------------------------------------------------------------------
IMG = 16          # input image H = W (original SAM: 1024)
PATCH = 4         # patch size (original SAM: 16)
CIN = 3           # input channels
D = 32            # hidden dim (original SAM ViT-B: 768)
MLP = 64          # encoder MLP hidden
GRID = IMG // PATCH          # 4x4 embedding grid
T = GRID * GRID              # 16 tokens
UPC = 8                      # upscaled-embedding channels (original: 32)
ORIG = 32                    # "original_sizes" H = W
PP = PATCH * PATCH           # pixels per patch (16); PP * UPC = 128 lanes
LANES = 128

# sigmoid(x) > 0.85  <=>  x > logit(0.85): lets us drop the sigmoid entirely.
_LOGIT_085 = math.log(0.85 / 0.15)


# ----------------------------------------------------------------------------
# Parameter-slab layouts (static row/lane offsets used inside the kernel).
# All row counts (and therefore all offsets) are multiples of 8 so every
# in-kernel slice is sublane-tile aligned.
# ----------------------------------------------------------------------------
_W_LAYOUT = (                     # (name, rows, cols) in packing order
    ("patch_w",  CIN * PATCH * PATCH, D),
    ("pos_emb",  T,                  D),
    ("w_qkv",    D,              3 * D),
    ("wo",       D,                  D),
    ("mlp_w1",   D,                MLP),
    ("mlp_w2",   MLP,                D),
    ("dec_wq",   D,                  D),
    ("dec_wkv",  D,              2 * D),
    ("hyper_w1", D,                  D),
    ("hyper_w2", D,                UPC),
    ("up_w",     D,           PP * UPC),
    ("e_mat",    UPC,         PP * UPC),
    ("s_mat_t",  PP,          PP * UPC),
)
_W_OFFSET = {}
_row = 0
for _name, _rows, _cols in _W_LAYOUT:
    _W_OFFSET[_name] = (_row, _rows, _cols)
    _row += _rows
W_SLAB_ROWS = _row                # 408 (already a multiple of 8)

_V_LAYOUT = (                     # (name, width): one 1-row vector per slab row
    ("patch_b", D), ("ln1_g", D), ("ln1_b", D),
    ("b_qkv", 3 * D), ("bo", D),
    ("ln2_g", D), ("ln2_b", D),
    ("mlp_b1", MLP), ("mlp_b2", D),
    ("no_mask_emb", D), ("mask_token", D),
    ("dec_bq", D), ("dec_bkv", 2 * D),
    ("dec_ln_g", D), ("dec_ln_b", D),
    ("hyper_b1", D), ("hyper_b2", UPC), ("up_b", PP * UPC),
)
_V_ROW = {name: i for i, (name, _) in enumerate(_V_LAYOUT)}
_V_WIDTH = dict(_V_LAYOUT)
V_SLAB_ROWS = -(-len(_V_LAYOUT) // 8) * 8     # pad row count to a multiple of 8


# ----------------------------------------------------------------------------
# In-kernel helpers (pure functions on values / static ref slices)
# ----------------------------------------------------------------------------
def _mxu(a, b):
    """MXU matmul: bf16 operands (native rate on v5e/v6e/v7x), f32 accum."""
    return jnp.dot(a.astype(jnp.bfloat16), b.astype(jnp.bfloat16),
                   preferred_element_type=jnp.float32)


def _mxu_nt(a, b):
    """a @ b.T on the MXU without materializing the transpose."""
    return jax.lax.dot_general(
        a.astype(jnp.bfloat16), b.astype(jnp.bfloat16),
        dimension_numbers=(((1,), (1,)), ((), ())),
        preferred_element_type=jnp.float32)


def _layernorm(x, g, b):
    mu = jnp.mean(x, axis=-1, keepdims=True)
    var = jnp.mean((x - mu) ** 2, axis=-1, keepdims=True)
    return (x - mu) * jax.lax.rsqrt(var + 1e-6) * g + b


def _softmax(s):
    s = s - jnp.max(s, axis=-1, keepdims=True)
    p = jnp.exp(s)
    # divide -> EUP reciprocal (otherwise-idle slot) instead of a VALU divide
    return p * pl.reciprocal(jnp.sum(p, axis=-1, keepdims=True), approx=True)


def _w(w_ref, name):
    """Static, 8-row-aligned view into the packed weight slab (zero cost)."""
    off, rows, cols = _W_OFFSET[name]
    return w_ref[off:off + rows, 0:cols]


def _v(vecs, name):
    """One (1, width) vector out of the already-loaded vector slab."""
    i = _V_ROW[name]
    return vecs[i:i + 1, 0:_V_WIDTH[name]]


# ----------------------------------------------------------------------------
# The single fused kernel: encoder + prompt encoder + decoder + mask head +
# threshold, all in VMEM / vregs.  Batch 0 only (reference thresholds probs[0]).
# ----------------------------------------------------------------------------
def _medsam_fused_kernel(x_ref, w_ref, v_ref, o_ref):
    vecs = v_ref[...]                                          # (V_ROWS, 128)
    scale = 1.0 / math.sqrt(D)

    # ---- image encoder: patch embed + pos emb + 1 transformer block --------
    x = x_ref[...]                                             # (T, C*P*P)
    h = _mxu(x, _w(w_ref, "patch_w")) + _v(vecs, "patch_b")    # (T, D)
    h = h + _w(w_ref, "pos_emb")

    hn = _layernorm(h, _v(vecs, "ln1_g"), _v(vecs, "ln1_b"))
    # fused q|k|v projection: one MXU push, 32-lane slices of the result
    qkv = _mxu(hn, _w(w_ref, "w_qkv")) + _v(vecs, "b_qkv")     # (T, 3D)
    q = qkv[:, 0:D]
    k = qkv[:, D:2 * D]
    v = qkv[:, 2 * D:3 * D]

    s = _mxu_nt(q, k) * scale                                  # (T, T)
    ctx = _mxu(_softmax(s), v)                                 # (T, D), in vregs
    h = h + _mxu(ctx, _w(w_ref, "wo")) + _v(vecs, "bo")

    hn = _layernorm(h, _v(vecs, "ln2_g"), _v(vecs, "ln2_b"))
    m = jax.nn.gelu(_mxu(hn, _w(w_ref, "mlp_w1")) + _v(vecs, "mlp_b1"),
                    approximate=True)
    m = _mxu(m, _w(w_ref, "mlp_w2")) + _v(vecs, "mlp_b2")
    img_emb = h + m                                            # (T, D)

    # ---- prompt encoder: dense "no mask" embedding --------------------------
    # TODO(synk): the sparse box embedding only matters once the two-way
    # decoder exists; it is omitted here so no dead DMA / matmul remains.
    src0 = img_emb + _v(vecs, "no_mask_emb")

    # ---- mask decoder: single cross-attention from the mask token ----------
    mask_tok = _v(vecs, "mask_token")                          # (1, D)
    q0 = _mxu(mask_tok, _w(w_ref, "dec_wq")) + _v(vecs, "dec_bq")
    kv0 = _mxu(src0, _w(w_ref, "dec_wkv")) + _v(vecs, "dec_bkv")   # (T, 2D)
    k0 = kv0[:, 0:D]
    v0 = kv0[:, D:2 * D]
    s0 = _mxu_nt(q0, k0) * scale                               # (1, T)
    tok = mask_tok + _mxu(_softmax(s0), v0)                    # (1, D)
    tok = _layernorm(tok, _v(vecs, "dec_ln_g"), _v(vecs, "dec_ln_b"))

    # hypernetwork MLP on the mask token
    hyp = jax.nn.gelu(_mxu(tok, _w(w_ref, "hyper_w1")) + _v(vecs, "hyper_b1"),
                      approximate=True)
    hyp = _mxu(hyp, _w(w_ref, "hyper_w2")) + _v(vecs, "hyper_b2")   # (1, UPC)

    # ---- mask head, kept in f32 (feeds a hard 0.85 threshold) --------------
    #   up0[t, p*UPC + c]     : upscaled embedding, lane-dense (T, 128)
    #   e_mat[c, p*UPC + c']=1 iff c'==c : broadcast hyp[c] to every pixel
    #   s_mat_t[p, l]=1 iff l//UPC==p    : sum the UPC channels per pixel
    up0 = jnp.dot(img_emb, _w(w_ref, "up_w"),
                  preferred_element_type=jnp.float32) + _v(vecs, "up_b")
    hyper_lane = jnp.dot(hyp, _w(w_ref, "e_mat"),
                         preferred_element_type=jnp.float32)   # (1, PP*UPC)
    logits0 = jax.lax.dot_general(
        up0 * hyper_lane, _w(w_ref, "s_mat_t"),
        dimension_numbers=(((1,), (1,)), ((), ())),
        preferred_element_type=jnp.float32)                    # (T, PP)

    # sigmoid(x) > 0.85  <=>  x > logit(0.85);  * 255 int mask (batch 0)
    o_ref[...] = (logits0 > _LOGIT_085).astype(jnp.int32) * 255


# ----------------------------------------------------------------------------
# Deterministic parameter init (synthetic stand-in for the pretrained weights)
# ----------------------------------------------------------------------------
def init_params():
    key = jax.random.PRNGKey(42)

    def nxt():
        nonlocal key
        key, sub = jax.random.split(key)
        return sub

    def w(shape, scale=0.02):
        return (scale * jax.random.normal(nxt(), shape)).astype(jnp.float32)

    def zeros(shape):
        return jnp.zeros(shape, jnp.float32)

    def ones(shape):
        return jnp.ones(shape, jnp.float32)

    return {
        # image encoder
        "patch_w": w((CIN * PATCH * PATCH, D)), "patch_b": zeros((1, D)),
        "pos_emb": w((T, D)),
        "ln1_g": ones((1, D)), "ln1_b": zeros((1, D)),
        "wq": w((D, D)), "bq": zeros((1, D)),
        "wk": w((D, D)), "bk": zeros((1, D)),
        "wv": w((D, D)), "bv": zeros((1, D)),
        "wo": w((D, D)), "bo": zeros((1, D)),
        "ln2_g": ones((1, D)), "ln2_b": zeros((1, D)),
        "mlp_w1": w((D, MLP)), "mlp_b1": zeros((1, MLP)),
        "mlp_w2": w((MLP, D)), "mlp_b2": zeros((1, D)),
        # prompt encoder (dense path only; box path is dead in this reduced
        # decoder and therefore not materialized -- see kernel TODO)
        "no_mask_emb": w((1, D)),
        # mask decoder
        "mask_token": w((1, D)),
        "dec_ln_g": ones((1, D)), "dec_ln_b": zeros((1, D)),
        "dec_wq": w((D, D)), "dec_bq": zeros((1, D)),
        "dec_wk": w((D, D)), "dec_bk": zeros((1, D)),
        "dec_wv": w((D, D)), "dec_bv": zeros((1, D)),
        "hyper_w1": w((D, D)), "hyper_b1": zeros((1, D)),
        "hyper_w2": w((D, UPC)), "hyper_b2": zeros((1, UPC)),
        "up_w": w((D, PP * UPC)), "up_b": zeros((1, PP * UPC)),
    }


def pack_params(p):
    """Pack all parameters into two lane-dense (rows, 128) f32 slabs.

    Done once, outside the jitted forward, so the steady-state call only
    DMAs three arrays into the kernel.
    """
    def pad128(a):
        return jnp.pad(a.astype(jnp.float32), ((0, 0), (0, LANES - a.shape[1])))

    # constant gather / reduce matrices for the f32 mask head
    cols = jnp.arange(PP * UPC)
    e_mat = (cols[None, :] % UPC == jnp.arange(UPC)[:, None]).astype(jnp.float32)
    s_mat_t = (cols[None, :] // UPC == jnp.arange(PP)[:, None]).astype(jnp.float32)

    w_parts = {
        "patch_w": p["patch_w"],
        "pos_emb": p["pos_emb"],
        "w_qkv": jnp.concatenate([p["wq"], p["wk"], p["wv"]], axis=1),
        "wo": p["wo"],
        "mlp_w1": p["mlp_w1"],
        "mlp_w2": p["mlp_w2"],
        "dec_wq": p["dec_wq"],
        "dec_wkv": jnp.concatenate([p["dec_wk"], p["dec_wv"]], axis=1),
        "hyper_w1": p["hyper_w1"],
        "hyper_w2": p["hyper_w2"],
        "up_w": p["up_w"],
        "e_mat": e_mat,
        "s_mat_t": s_mat_t,
    }
    w_slab = jnp.concatenate(
        [pad128(w_parts[name]) for name, _, _ in _W_LAYOUT], axis=0)
    assert w_slab.shape == (W_SLAB_ROWS, LANES), w_slab.shape

    v_parts = {
        "patch_b": p["patch_b"], "ln1_g": p["ln1_g"], "ln1_b": p["ln1_b"],
        "b_qkv": jnp.concatenate([p["bq"], p["bk"], p["bv"]], axis=1),
        "bo": p["bo"],
        "ln2_g": p["ln2_g"], "ln2_b": p["ln2_b"],
        "mlp_b1": p["mlp_b1"], "mlp_b2": p["mlp_b2"],
        "no_mask_emb": p["no_mask_emb"], "mask_token": p["mask_token"],
        "dec_bq": p["dec_bq"],
        "dec_bkv": jnp.concatenate([p["dec_bk"], p["dec_bv"]], axis=1),
        "dec_ln_g": p["dec_ln_g"], "dec_ln_b": p["dec_ln_b"],
        "hyper_b1": p["hyper_b1"], "hyper_b2": p["hyper_b2"],
        "up_b": p["up_b"],
    }
    v_slab = jnp.concatenate(
        [pad128(v_parts[name]) for name, _ in _V_LAYOUT], axis=0)
    v_slab = jnp.pad(v_slab, ((0, V_SLAB_ROWS - v_slab.shape[0]), (0, 0)))
    assert v_slab.shape == (V_SLAB_ROWS, LANES), v_slab.shape

    return w_slab, v_slab


# ----------------------------------------------------------------------------
# Forward pass: plain-JAX layout glue + one no-grid fused pallas_call
# ----------------------------------------------------------------------------
@jax.jit
def medsam_forward(w_slab, v_slab, pixel_values, input_boxes,
                   original_sizes, reshaped_input_sizes):
    # TODO(synk): input_boxes only influence pred_masks through SAM's two-way
    # decoder, which this reduced single-cross-attention decoder omits, so
    # they are intentionally not DMA'd into the kernel.
    del input_boxes, original_sizes, reshaped_input_sizes

    # Only batch 0 is encoded: the torch reference thresholds probs[0] only.
    # patchify CHW -> token-major (T, CIN*PATCH*PATCH); feature dim last.
    x0 = pixel_values[0].reshape(CIN, GRID, PATCH, GRID, PATCH)
    x0 = x0.transpose(1, 3, 0, 2, 4).reshape(T, CIN * PATCH * PATCH)

    vmem = pltpu.MemorySpace.VMEM
    bin_tp = pl.pallas_call(
        _medsam_fused_kernel,
        out_shape=jax.ShapeDtypeStruct((T, PP), jnp.int32),
        in_specs=[pl.BlockSpec(memory_space=vmem) for _ in range(3)],
        out_specs=pl.BlockSpec(memory_space=vmem),
    )(x0, w_slab, v_slab)

    # glue: (token, in-patch) order -> pixel order, nearest-neighbor upsample
    low = bin_tp.reshape(GRID, GRID, PATCH, PATCH)
    low = low.transpose(0, 2, 1, 3).reshape(IMG, IMG)
    scale = ORIG // IMG
    up = jnp.repeat(jnp.repeat(low, scale, axis=0), scale, axis=1)
    return up.reshape(1, 1, ORIG, ORIG)


# ----------------------------------------------------------------------------
if __name__ == "__main__":
    key = jax.random.PRNGKey(0)
    k_pv, _ = jax.random.split(key)

    B = 2
    pixel_values = jax.random.normal(k_pv, (B, CIN, IMG, IMG), jnp.float32)
    input_boxes = jnp.array([[[2.0, 2.0, 12.0, 12.0]],
                             [[4.0, 4.0, 14.0, 14.0]]], jnp.float32)   # (B,1,4)
    original_sizes = jnp.array([[ORIG, ORIG]] * B, jnp.int32)          # (B, 2)
    reshaped_input_sizes = jnp.array([[IMG, IMG]] * B, jnp.int32)      # (B, 2)

    params = init_params()
    w_slab, v_slab = pack_params(params)          # packed once, outside jit

    out = medsam_forward(w_slab, v_slab, pixel_values, input_boxes,
                         original_sizes, reshaped_input_sizes)
    out = jax.block_until_ready(out)

    assert out.shape == (1, 1, ORIG, ORIG), out.shape
    assert out.dtype == jnp.int32, out.dtype
    print("KERNEL_OK")
</pallas_src>

<mosaic_0001>
module attributes {stable_mosaic.version = 11 : i64} {
  func.func @_medsam_fused_kernel(%arg0: memref<16x48xf32, #tpu.memory_space<vmem>>, %arg1: memref<408x128xf32, #tpu.memory_space<vmem>>, %arg2: memref<24x128xf32, #tpu.memory_space<vmem>>, %arg3: memref<16x16xi32, #tpu.memory_space<vmem>>) attributes {dimension_semantics = [], scalar_prefetch = 0 : i64, scratch_operands = 0 : i64, tpu.core_type = #tpu.core_type<tc>} {
    %c0 = arith.constant 0 : index
    %c0_0 = arith.constant 0 : index
    %0 = vector.load %arg2[%c0, %c0_0] : memref<24x128xf32, #tpu.memory_space<vmem>>, vector<24x128xf32>
    %c0_1 = arith.constant 0 : index
    %c0_2 = arith.constant 0 : index
    %1 = vector.load %arg0[%c0_1, %c0_2] : memref<16x48xf32, #tpu.memory_space<vmem>>, vector<16x48xf32>
    %c0_3 = arith.constant 0 : index
    %c0_4 = arith.constant 0 : index
    %2 = vector.load %arg1[%c0_3, %c0_4] : memref<408x128xf32, #tpu.memory_space<vmem>>, vector<48x32xf32>
    %3 = arith.truncf %1 : vector<16x48xf32> to vector<16x48xbf16>
    %4 = arith.truncf %2 : vector<48x32xf32> to vector<48x32xbf16>
    %cst = arith.constant dense<0.000000e+00> : vector<16x32xf32>
    %5 = tpu.matmul %3, %4, %cst {dimension_numbers = #tpu.dot_dimension_numbers<[1], [0], [0], [1], [0, 0, 1, 1], [], []>} : vector<16x48xbf16>, vector<48x32xbf16>, vector<16x32xf32> -> vector<16x32xf32>
    %6 = vector.extract_strided_slice %0 {offsets = [0, 0], sizes = [1, 32], strides = [1, 1]} : vector<24x128xf32> to vector<1x32xf32>
    %7 = vector.broadcast %6 : vector<1x32xf32> to vector<16x32xf32>
    %8 = arith.addf %5, %7 : vector<16x32xf32>
    %c48 = arith.constant 48 : index
    %c0_5 = arith.constant 0 : index
    %9 = vector.load %arg1[%c48, %c0_5] : memref<408x128xf32, #tpu.memory_space<vmem>>, vector<16x32xf32>
    %10 = arith.addf %8, %9 : vector<16x32xf32>
    %11 = vector.extract_strided_slice %0 {offsets = [1, 0], sizes = [1, 32], strides = [1, 1]} : vector<24x128xf32> to vector<1x32xf32>
    %12 = vector.extract_strided_slice %0 {offsets = [2, 0], sizes = [1, 32], strides = [1, 1]} : vector<24x128xf32> to vector<1x32xf32>
    %cst_6 = arith.constant dense<0.000000e+00> : vector<16xf32>
    %13 = vector.multi_reduction <add>, %10, %cst_6 [1] : vector<16x32xf32> to vector<16xf32>
    %14 = vector.shape_cast %13 : vector<16xf32> to vector<16x1xf32>
    %cst_7 = arith.constant 3.200000e+01 : f32
    %15 = vector.broadcast %cst_7 : f32 to vector<16x1xf32>
    %16 = arith.divf %14, %15 : vector<16x1xf32>
    %17 = vector.broadcast %16 : vector<16x1xf32> to vector<16x32xf32>
    %18 = arith.subf %10, %17 : vector<16x32xf32>
    %19 = arith.mulf %18, %18 : vector<16x32xf32>
    %cst_8 = arith.constant dense<0.000000e+00> : vector<16xf32>
    %20 = vector.multi_reduction <add>, %19, %cst_8 [1] : vector<16x32xf32> to vector<16xf32>
    %21 = vector.shape_cast %20 : vector<16xf32> to vector<16x1xf32>
    %cst_9 = arith.constant 3.200000e+01 : f32
    %22 = vector.broadcast %cst_9 : f32 to vector<16x1xf32>
    %23 = arith.divf %21, %22 : vector<16x1xf32>
    %24 = vector.broadcast %16 : vector<16x1xf32> to vector<16x32xf32>
    %25 = arith.subf %10, %24 : vector<16x32xf32>
    %cst_10 = arith.constant 9.99999997E-7 : f32
    %26 = vector.broadcast %cst_10 : f32 to vector<16x1xf32>
    %27 = arith.addf %23, %26 : vector<16x1xf32>
    %28 = math.rsqrt %27 : vector<16x1xf32>
    %29 = vector.broadcast %28 : vector<16x1xf32> to vector<16x32xf32>
    %30 = arith.mulf %25, %29 : vector<16x32xf32>
    %31 = vector.broadcast %11 : vector<1x32xf32> to vector<16x32xf32>
    %32 = arith.mulf %30, %31 : vector<16x32xf32>
    %33 = vector.broadcast %12 : vector<1x32xf32> to vector<16x32xf32>
    %34 = arith.addf %32, %33 : vector<16x32xf32>
    %c64 = arith.constant 64 : index
    %c0_11 = arith.constant 0 : index
    %35 = vector.load %arg1[%c64, %c0_11] : memref<408x128xf32, #tpu.memory_space<vmem>>, vector<32x96xf32>
    %36 = arith.truncf %34 : vector<16x32xf32> to vector<16x32xbf16>
    %37 = arith.truncf %35 : vector<32x96xf32> to vector<32x96xbf16>
    %cst_12 = arith.constant dense<0.000000e+00> : vector<16x96xf32>
    %38 = tpu.matmul %36, %37, %cst_12 {dimension_numbers = #tpu.dot_dimension_numbers<[1], [0], [0], [1], [0, 0, 1, 1], [], []>} : vector<16x32xbf16>, vector<32x96xbf16>, vector<16x96xf32> -> vector<16x96xf32>
    %39 = vector.extract_strided_slice %0 {offsets = [3, 0], sizes = [1, 96], strides = [1, 1]} : vector<24x128xf32> to vector<1x96xf32>
    %40 = vector.broadcast %39 : vector<1x96xf32> to vector<16x96xf32>
    %41 = arith.addf %38, %40 : vector<16x96xf32>
    %42 = vector.extract_strided_slice %41 {offsets = [0, 0], sizes = [16, 32], strides = [1, 1]} : vector<16x96xf32> to vector<16x32xf32>
    %43 = vector.extract_strided_slice %41 {offsets = [0, 32], sizes = [16, 32], strides = [1, 1]} : vector<16x96xf32> to vector<16x32xf32>
    %44 = vector.extract_strided_slice %41 {offsets = [0, 64], sizes = [16, 32], strides = [1, 1]} : vector<16x96xf32> to vector<16x32xf32>
    %45 = arith.truncf %42 : vector<16x32xf32> to vector<16x32xbf16>
    %46 = arith.truncf %43 : vector<16x32xf32> to vector<16x32xbf16>
    %cst_13 = arith.constant dense<0.000000e+00> : vector<16x16xf32>
    %47 = tpu.matmul %45, %46, %cst_13 {dimension_numbers = #tpu.dot_dimension_numbers<[1], [1], [0], [0], [0, 0, 1, 0], [], []>} : vector<16x32xbf16>, vector<16x32xbf16>, vector<16x16xf32> -> vector<16x16xf32>
    %cst_14 = arith.constant 0.176776692 : f32
    %48 = vector.broadcast %cst_14 : f32 to vector<16x16xf32>
    %49 = arith.mulf %47, %48 : vector<16x16xf32>
    %cst_15 = arith.constant dense<0xFF800000> : vector<16xf32>
    %50 = vector.multi_reduction <maximumf>, %49, %cst_15 [1] : vector<16x16xf32> to vector<16xf32>
    %51 = vector.shape_cast %50 : vector<16xf32> to vector<16x1xf32>
    %52 = vector.broadcast %51 : vector<16x1xf32> to vector<16x16xf32>
    %53 = arith.subf %49, %52 : vector<16x16xf32>
    %54 = math.exp %53 : vector<16x16xf32>
    %cst_16 = arith.constant dense<0.000000e+00> : vector<16xf32>
    %55 = vector.multi_reduction <add>, %54, %cst_16 [1] : vector<16x16xf32> to vector<16xf32>
    %56 = vector.shape_cast %55 : vector<16xf32> to vector<16x1xf32>
    %57 = tpu.reciprocal %56 {approx = true} : vector<16x1xf32> -> vector<16x1xf32>
    %58 = vector.broadcast %57 : vector<16x1xf32> to vector<16x16xf32>
    %59 = arith.mulf %54, %58 : vector<16x16xf32>
    %60 = arith.truncf %59 : vector<16x16xf32> to vector<16x16xbf16>
    %61 = arith.truncf %44 : vector<16x32xf32> to vector<16x32xbf16>
    %cst_17 = arith.constant dense<0.000000e+00> : vector<16x32xf32>
    %62 = tpu.matmul %60, %61, %cst_17 {dimension_numbers = #tpu.dot_dimension_numbers<[1], [0], [0], [1], [0, 0, 1, 1], [], []>} : vector<16x16xbf16>, vector<16x32xbf16>, vector<16x32xf32> -> vector<16x32xf32>
    %c96 = arith.constant 96 : index
    %c0_18 = arith.constant 0 : index
    %63 = vector.load %arg1[%c96, %c0_18] : memref<408x128xf32, #tpu.memory_space<vmem>>, vector<32x32xf32>
    %64 = arith.truncf %62 : vector<16x32xf32> to vector<16x32xbf16>
    %65 = arith.truncf %63 : vector<32x32xf32> to vector<32x32xbf16>
    %cst_19 = arith.constant dense<0.000000e+00> : vector<16x32xf32>
    %66 = tpu.matmul %64, %65, %cst_19 {dimension_numbers = #tpu.dot_dimension_numbers<[1], [0], [0], [1], [0, 0, 1, 1], [], []>} : vector<16x32xbf16>, vector<32x32xbf16>, vector<16x32xf32> -> vector<16x32xf32>
    %67 = arith.addf %10, %66 : vector<16x32xf32>
    %68 = vector.extract_strided_slice %0 {offsets = [4, 0], sizes = [1, 32], strides = [1, 1]} : vector<24x128xf32> to vector<1x32xf32>
    %69 = vector.broadcast %68 : vector<1x32xf32> to vector<16x32xf32>
    %70 = arith.addf %67, %69 : vector<16x32xf32>
    %71 = vector.extract_strided_slice %0 {offsets = [5, 0], sizes = [1, 32], strides = [1, 1]} : vector<24x128xf32> to vector<1x32xf32>
    %72 = vector.extract_strided_slice %0 {offsets = [6, 0], sizes = [1, 32], strides = [1, 1]} : vector<24x128xf32> to vector<1x32xf32>
    %cst_20 = arith.constant dense<0.000000e+00> : vector<16xf32>
    %73 = vector.multi_reduction <add>, %70, %cst_20 [1] : vector<16x32xf32> to vector<16xf32>
    %74 = vector.shape_cast %73 : vector<16xf32> to vector<16x1xf32>
    %cst_21 = arith.constant 3.200000e+01 : f32
    %75 = vector.broadcast %cst_21 : f32 to vector<16x1xf32>
    %76 = arith.divf %74, %75 : vector<16x1xf32>
    %77 = vector.broadcast %76 : vector<16x1xf32> to vector<16x32xf32>
    %78 = arith.subf %70, %77 : vector<16x32xf32>
    %79 = arith.mulf %78, %78 : vector<16x32xf32>
    %cst_22 = arith.constant dense<0.000000e+00> : vector<16xf32>
    %80 = vector.multi_reduction <add>, %79, %cst_22 [1] : vector<16x32xf32> to vector<16xf32>
    %81 = vector.shape_cast %80 : vector<16xf32> to vector<16x1xf32>
    %cst_23 = arith.constant 3.200000e+01 : f32
    %82 = vector.broadcast %cst_23 : f32 to vector<16x1xf32>
    %83 = arith.divf %81, %82 : vector<16x1xf32>
    %84 = vector.broadcast %76 : vector<16x1xf32> to vector<16x32xf32>
    %85 = arith.subf %70, %84 : vector<16x32xf32>
    %cst_24 = arith.constant 9.99999997E-7 : f32
    %86 = vector.broadcast %cst_24 : f32 to vector<16x1xf32>
    %87 = arith.addf %83, %86 : vector<16x1xf32>
    %88 = math.rsqrt %87 : vector<16x1xf32>
    %89 = vector.broadcast %88 : vector<16x1xf32> to vector<16x32xf32>
    %90 = arith.mulf %85, %89 : vector<16x32xf32>
    %91 = vector.broadcast %71 : vector<1x32xf32> to vector<16x32xf32>
    %92 = arith.mulf %90, %91 : vector<16x32xf32>
    %93 = vector.broadcast %72 : vector<1x32xf32> to vector<16x32xf32>
    %94 = arith.addf %92, %93 : vector<16x32xf32>
    %c128 = arith.constant 128 : index
    %c0_25 = arith.constant 0 : index
    %95 = vector.load %arg1[%c128, %c0_25] : memref<408x128xf32, #tpu.memory_space<vmem>>, vector<32x64xf32>
    %96 = arith.truncf %94 : vector<16x32xf32> to vector<16x32xbf16>
    %97 = arith.truncf %95 : vector<32x64xf32> to vector<32x64xbf16>
    %cst_26 = arith.constant dense<0.000000e+00> : vector<16x64xf32>
    %98 = tpu.matmul %96, %97, %cst_26 {dimension_numbers = #tpu.dot_dimension_numbers<[1], [0], [0], [1], [0, 0, 1, 1], [], []>} : vector<16x32xbf16>, vector<32x64xbf16>, vector<16x64xf32> -> vector<16x64xf32>
    %99 = vector.extract_strided_slice %0 {offsets = [7, 0], sizes = [1, 64], strides = [1, 1]} : vector<24x128xf32> to vector<1x64xf32>
    %100 = vector.broadcast %99 : vector<1x64xf32> to vector<16x64xf32>
    %101 = arith.addf %98, %100 : vector<16x64xf32>
    %102 = arith.mulf %101, %101 : vector<16x64xf32>
    %103 = arith.mulf %101, %102 : vector<16x64xf32>
    %cst_27 = arith.constant 4.471500e-02 : f32
    %104 = vector.broadcast %cst_27 : f32 to vector<16x64xf32>
    %105 = arith.mulf %104, %103 : vector<16x64xf32>
    %106 = arith.addf %101, %105 : vector<16x64xf32>
    %cst_28 = arith.constant 0.797884583 : f32
    %107 = vector.broadcast %cst_28 : f32 to vector<16x64xf32>
    %108 = arith.mulf %107, %106 : vector<16x64xf32>
    %109 = math.tanh %108 : vector<16x64xf32>
    %cst_29 = arith.constant 1.000000e+00 : f32
    %110 = vector.broadcast %cst_29 : f32 to vector<16x64xf32>
    %111 = arith.addf %110, %109 : vector<16x64xf32>
    %cst_30 = arith.constant 5.000000e-01 : f32
    %112 = vector.broadcast %cst_30 : f32 to vector<16x64xf32>
    %113 = arith.mulf %112, %111 : vector<16x64xf32>
    %114 = arith.mulf %101, %113 : vector<16x64xf32>
    %c160 = arith.constant 160 : index
    %c0_31 = arith.constant 0 : index
    %115 = vector.load %arg1[%c160, %c0_31] : memref<408x128xf32, #tpu.memory_space<vmem>>, vector<64x32xf32>
    %116 = arith.truncf %114 : vector<16x64xf32> to vector<16x64xbf16>
    %117 = arith.truncf %115 : vector<64x32xf32> to vector<64x32xbf16>
    %cst_32 = arith.constant dense<0.000000e+00> : vector<16x32xf32>
    %118 = tpu.matmul %116, %117, %cst_32 {dimension_numbers = #tpu.dot_dimension_numbers<[1], [0], [0], [1], [0, 0, 1, 1], [], []>} : vector<16x64xbf16>, vector<64x32xbf16>, vector<16x32xf32> -> vector<16x32xf32>
    %119 = vector.extract_strided_slice %0 {offsets = [8, 0], sizes = [1, 32], strides = [1, 1]} : vector<24x128xf32> to vector<1x32xf32>
    %120 = vector.broadcast %119 : vector<1x32xf32> to vector<16x32xf32>
    %121 = arith.addf %118, %120 : vector<16x32xf32>
    %122 = arith.addf %70, %121 : vector<16x32xf32>
    %123 = vector.extract_strided_slice %0 {offsets = [9, 0], sizes = [1, 32], strides = [1, 1]} : vector<24x128xf32> to vector<1x32xf32>
    %124 = vector.broadcast %123 : vector<1x32xf32> to vector<16x32xf32>
    %125 = arith.addf %122, %124 : vector<16x32xf32>
    %126 = vector.extract_strided_slice %0 {offsets = [10, 0], sizes = [1, 32], strides = [1, 1]} : vector<24x128xf32> to vector<1x32xf32>
    %c224 = arith.constant 224 : index
    %c0_33 = arith.constant 0 : index
    %127 = vector.load %arg1[%c224, %c0_33] : memref<408x128xf32, #tpu.memory_space<vmem>>, vector<32x32xf32>
    %128 = arith.truncf %126 : vector<1x32xf32> to vector<1x32xbf16>
    %129 = arith.truncf %127 : vector<32x32xf32> to vector<32x32xbf16>
    %cst_34 = arith.constant dense<0.000000e+00> : vector<1x32xf32>
    %130 = tpu.matmul %128, %129, %cst_34 {dimension_numbers = #tpu.dot_dimension_numbers<[1], [0], [0], [1], [0, 0, 1, 1], [], []>} : vector<1x32xbf16>, vector<32x32xbf16>, vector<1x32xf32> -> vector<1x32xf32>
    %131 = vector.extract_strided_slice %0 {offsets = [11, 0], sizes = [1, 32], strides = [1, 1]} : vector<24x128xf32> to vector<1x32xf32>
    %132 = arith.addf %130, %131 : vector<1x32xf32>
    %c256 = arith.constant 256 : index
    %c0_35 = arith.constant 0 : index
    %133 = vector.load %arg1[%c256, %c0_35] : memref<408x128xf32, #tpu.memory_space<vmem>>, vector<32x64xf32>
    %134 = arith.truncf %125 : vector<16x32xf32> to vector<16x32xbf16>
    %135 = arith.truncf %133 : vector<32x64xf32> to vector<32x64xbf16>
    %cst_36 = arith.constant dense<0.000000e+00> : vector<16x64xf32>
    %136 = tpu.matmul %134, %135, %cst_36 {dimension_numbers = #tpu.dot_dimension_numbers<[1], [0], [0], [1], [0, 0, 1, 1], [], []>} : vector<16x32xbf16>, vector<32x64xbf16>, vector<16x64xf32> -> vector<16x64xf32>
    %137 = vector.extract_strided_slice %0 {offsets = [12, 0], sizes = [1, 64], strides = [1, 1]} : vector<24x128xf32> to vector<1x64xf32>
    %138 = vector.broadcast %137 : vector<1x64xf32> to vector<16x64xf32>
    %139 = arith.addf %136, %138 : vector<16x64xf32>
    %140 = vector.extract_strided_slice %139 {offsets = [0, 0], sizes = [16, 32], strides = [1, 1]} : vector<16x64xf32> to vector<16x32xf32>
    %141 = vector.extract_strided_slice %139 {offsets = [0, 32], sizes = [16, 32], strides = [1, 1]} : vector<16x64xf32> to vector<16x32xf32>
    %142 = arith.truncf %132 : vector<1x32xf32> to vector<1x32xbf16>
    %143 = arith.truncf %140 : vector<16x32xf32> to vector<16x32xbf16>
    %cst_37 = arith.constant dense<0.000000e+00> : vector<1x16xf32>
    %144 = tpu.matmul %142, %143, %cst_37 {dimension_numbers = #tpu.dot_dimension_numbers<[1], [1], [0], [0], [0, 0, 1, 0], [], []>} : vector<1x32xbf16>, vector<16x32xbf16>, vector<1x16xf32> -> vector<1x16xf32>
    %cst_38 = arith.constant 0.176776692 : f32
    %145 = vector.broadcast %cst_38 : f32 to vector<1x16xf32>
    %146 = arith.mulf %144, %145 : vector<1x16xf32>
    %cst_39 = arith.constant dense<0xFF800000> : vector<1xf32>
    %147 = vector.multi_reduction <maximumf>, %146, %cst_39 [1] : vector<1x16xf32> to vector<1xf32>
    %148 = vector.shape_cast %147 : vector<1xf32> to vector<1x1xf32>
    %149 = vector.broadcast %148 : vector<1x1xf32> to vector<1x16xf32>
    %150 = arith.subf %146, %149 : vector<1x16xf32>
    %151 = math.exp %150 : vector<1x16xf32>
    %cst_40 = arith.constant dense<0.000000e+00> : vector<1xf32>
    %152 = vector.multi_reduction <add>, %151, %cst_40 [1] : vector<1x16xf32> to vector<1xf32>
    %153 = vector.shape_cast %152 : vector<1xf32> to vector<1x1xf32>
    %154 = tpu.reciprocal %153 {approx = true} : vector<1x1xf32> -> vector<1x1xf32>
    %155 = vector.broadcast %154 : vector<1x1xf32> to vector<1x16xf32>
    %156 = arith.mulf %151, %155 : vector<1x16xf32>
    %157 = arith.truncf %156 : vector<1x16xf32> to vector<1x16xbf16>
    %158 = arith.truncf %141 : vector<16x32xf32> to vector<16x32xbf16>
    %cst_41 = arith.constant dense<0.000000e+00> : vector<1x32xf32>
    %159 = tpu.matmul %157, %158, %cst_41 {dimension_numbers = #tpu.dot_dimension_numbers<[1], [0], [0], [1], [0, 0, 1, 1], [], []>} : vector<1x16xbf16>, vector<16x32xbf16>, vector<1x32xf32> -> vector<1x32xf32>
    %160 = arith.addf %126, %159 : vector<1x32xf32>
    %161 = vector.extract_strided_slice %0 {offsets = [13, 0], sizes = [1, 32], strides = [1, 1]} : vector<24x128xf32> to vector<1x32xf32>
    %162 = vector.extract_strided_slice %0 {offsets = [14, 0], sizes = [1, 32], strides = [1, 1]} : vector<24x128xf32> to vector<1x32xf32>
    %cst_42 = arith.constant dense<0.000000e+00> : vector<1xf32>
    %163 = vector.multi_reduction <add>, %160, %cst_42 [1] : vector<1x32xf32> to vector<1xf32>
    %164 = vector.shape_cast %163 : vector<1xf32> to vector<1x1xf32>
    %cst_43 = arith.constant 3.200000e+01 : f32
    %165 = vector.broadcast %cst_43 : f32 to vector<1x1xf32>
    %166 = arith.divf %164, %165 : vector<1x1xf32>
    %167 = vector.broadcast %166 : vector<1x1xf32> to vector<1x32xf32>
    %168 = arith.subf %160, %167 : vector<1x32xf32>
    %169 = arith.mulf %168, %168 : vector<1x32xf32>
    %cst_44 = arith.constant dense<0.000000e+00> : vector<1xf32>
    %170 = vector.multi_reduction <add>, %169, %cst_44 [1] : vector<1x32xf32> to vector<1xf32>
    %171 = vector.shape_cast %170 : vector<1xf32> to vector<1x1xf32>
    %cst_45 = arith.constant 3.200000e+01 : f32
    %172 = vector.broadcast %cst_45 : f32 to vector<1x1xf32>
    %173 = arith.divf %171, %172 : vector<1x1xf32>
    %174 = vector.broadcast %166 : vector<1x1xf32> to vector<1x32xf32>
    %175 = arith.subf %160, %174 : vector<1x32xf32>
    %cst_46 = arith.constant 9.99999997E-7 : f32
    %176 = vector.broadcast %cst_46 : f32 to vector<1x1xf32>
    %177 = arith.addf %173, %176 : vector<1x1xf32>
    %178 = math.rsqrt %177 : vector<1x1xf32>
    %179 = vector.broadcast %178 : vector<1x1xf32> to vector<1x32xf32>
    %180 = arith.mulf %175, %179 : vector<1x32xf32>
    %181 = arith.mulf %180, %161 : vector<1x32xf32>
    %182 = arith.addf %181, %162 : vector<1x32xf32>
    %c288 = arith.constant 288 : index
    %c0_47 = arith.constant 0 : index
    %183 = vector.load %arg1[%c288, %c0_47] : memref<408x128xf32, #tpu.memory_space<vmem>>, vector<32x32xf32>
    %184 = arith.truncf %182 : vector<1x32xf32> to vector<1x32xbf16>
    %185 = arith.truncf %183 : vector<32x32xf32> to vector<32x32xbf16>
    %cst_48 = arith.constant dense<0.000000e+00> : vector<1x32xf32>
    %186 = tpu.matmul %184, %185, %cst_48 {dimension_numbers = #tpu.dot_dimension_numbers<[1], [0], [0], [1], [0, 0, 1, 1], [], []>} : vector<1x32xbf16>, vector<32x32xbf16>, vector<1x32xf32> -> vector<1x32xf32>
    %187 = vector.extract_strided_slice %0 {offsets = [15, 0], sizes = [1, 32], strides = [1, 1]} : vector<24x128xf32> to vector<1x32xf32>
    %188 = arith.addf %186, %187 : vector<1x32xf32>
    %189 = arith.mulf %188, %188 : vector<1x32xf32>
    %190 = arith.mulf %188, %189 : vector<1x32xf32>
    %cst_49 = arith.constant 4.471500e-02 : f32
    %191 = vector.broadcast %cst_49 : f32 to vector<1x32xf32>
    %192 = arith.mulf %191, %190 : vector<1x32xf32>
    %193 = arith.addf %188, %192 : vector<1x32xf32>
    %cst_50 = arith.constant 0.797884583 : f32
    %194 = vector.broadcast %cst_50 : f32 to vector<1x32xf32>
    %195 = arith.mulf %194, %193 : vector<1x32xf32>
    %196 = math.tanh %195 : vector<1x32xf32>
    %cst_51 = arith.constant 1.000000e+00 : f32
    %197 = vector.broadcast %cst_51 : f32 to vector<1x32xf32>
    %198 = arith.addf %197, %196 : vector<1x32xf32>
    %cst_52 = arith.constant 5.000000e-01 : f32
    %199 = vector.broadcast %cst_52 : f32 to vector<1x32xf32>
    %200 = arith.mulf %199, %198 : vector<1x32xf32>
    %201 = arith.mulf %188, %200 : vector<1x32xf32>
    %c320 = arith.constant 320 : index
    %c0_53 = arith.constant 0 : index
    %202 = vector.load %arg1[%c320, %c0_53] : memref<408x128xf32, #tpu.memory_space<vmem>>, vector<32x8xf32>
    %203 = arith.truncf %201 : vector<1x32xf32> to vector<1x32xbf16>
    %204 = arith.truncf %202 : vector<32x8xf32> to vector<32x8xbf16>
    %cst_54 = arith.constant dense<0.000000e+00> : vector<1x8xf32>
    %205 = tpu.matmul %203, %204, %cst_54 {dimension_numbers = #tpu.dot_dimension_numbers<[1], [0], [0], [1], [0, 0, 1, 1], [], []>} : vector<1x32xbf16>, vector<32x8xbf16>, vector<1x8xf32> -> vector<1x8xf32>
    %206 = vector.extract_strided_slice %0 {offsets = [16, 0], sizes = [1, 8], strides = [1, 1]} : vector<24x128xf32> to vector<1x8xf32>
    %207 = arith.addf %205, %206 : vector<1x8xf32>
    %c352 = arith.constant 352 : index
    %c0_55 = arith.constant 0 : index
    %208 = vector.load %arg1[%c352, %c0_55] : memref<408x128xf32, #tpu.memory_space<vmem>>, vector<32x128xf32>
    %cst_56 = arith.constant dense<0.000000e+00> : vector<16x128xf32>
    %209 = tpu.matmul %122, %208, %cst_56 {dimension_numbers = #tpu.dot_dimension_numbers<[1], [0], [0], [1], [0, 0, 1, 1], [], []>} : vector<16x32xf32>, vector<32x128xf32>, vector<16x128xf32> -> vector<16x128xf32>
    %210 = vector.extract_strided_slice %0 {offsets = [17, 0], sizes = [1, 128], strides = [1, 1]} : vector<24x128xf32> to vector<1x128xf32>
    %211 = vector.broadcast %210 : vector<1x128xf32> to vector<16x128xf32>
    %212 = arith.addf %209, %211 : vector<16x128xf32>
    %c384 = arith.constant 384 : index
    %c0_57 = arith.constant 0 : index
    %213 = vector.load %arg1[%c384, %c0_57] : memref<408x128xf32, #tpu.memory_space<vmem>>, vector<8x128xf32>
    %cst_58 = arith.constant dense<0.000000e+00> : vector<1x128xf32>
    %214 = tpu.matmul %207, %213, %cst_58 {dimension_numbers = #tpu.dot_dimension_numbers<[1], [0], [0], [1], [0, 0, 1, 1], [], []>} : vector<1x8xf32>, vector<8x128xf32>, vector<1x128xf32> -> vector<1x128xf32>
    %215 = vector.broadcast %214 : vector<1x128xf32> to vector<16x128xf32>
    %216 = arith.mulf %212, %215 : vector<16x128xf32>
    %c392 = arith.constant 392 : index
    %c0_59 = arith.constant 0 : index
    %217 = vector.load %arg1[%c392, %c0_59] : memref<408x128xf32, #tpu.memory_space<vmem>>, vector<16x128xf32>
    %cst_60 = arith.constant dense<0.000000e+00> : vector<16x16xf32>
    %218 = tpu.matmul %216, %217, %cst_60 {dimension_numbers = #tpu.dot_dimension_numbers<[1], [1], [0], [0], [0, 0, 1, 0], [], []>} : vector<16x128xf32>, vector<16x128xf32>, vector<16x16xf32> -> vector<16x16xf32>
    %cst_61 = arith.constant 1.73460102 : f32
    %219 = vector.broadcast %cst_61 : f32 to vector<16x16xf32>
    %220 = arith.cmpf ogt, %218, %219 : vector<16x16xf32>
    %221 = arith.extui %220 : vector<16x16xi1> to vector<16x16xi32>
    %c255_i32 = arith.constant 255 : i32
    %222 = vector.broadcast %c255_i32 : i32 to vector<16x16xi32>
    %223 = arith.muli %221, %222 : vector<16x16xi32>
    %c0_62 = arith.constant 0 : index
    %c0_63 = arith.constant 0 : index
    %224 = vector.load %arg3[%c0_62, %c0_63] : memref<16x16xi32, #tpu.memory_space<vmem>>, vector<16x16xi32>
    tpu.vector_store %arg3[%c0_62, %c0_63], %223 {strides = array<i32>} : memref<16x16xi32, #tpu.memory_space<vmem>>, vector<16x16xi32>,
    return
  }
}

</mosaic_0001>

<llo_original>
// kernel: squeeze.1
$region0: #{squeeze.1}
  %s0 = inlined_call_operand.vmem [shape: f32[1,3,16,16], index: 0, kind: input, shape index: {}]
  %s1 = inlined_call_operand.vmem [shape: f32[3,4,4,4,4], index: 1, kind: output, shape index: {}]
  $region1: #{squeeze.1} parent=0
    #allocation0 [shape = 'u8[196608]{0}', space=vmem, size = 0x30000, scoped, tag = 'scoped mem for output reshape']
    %v2 = vld [vmem:[%s0] sm:$0xff]
    %vm3 = vcmask 31744
    %4 = vst.msk [vmem:[#allocation0] ss:$8 sm:$0xf] %vm3, %v2
    %5 = vst.msk [vmem:[#allocation0] ss:$8 sm:$0xf0] %vm3, %v2
    %s6 = scalar_lea.vmem %s0, 8
    %v7 = vld [vmem:[%s6] sm:$0xff]
    %vm8 = vcmask 31744
    %s9 = scalar_lea.vmem [#allocation0], 64
    %10 = vst.msk [vmem:[%s9] ss:$8 sm:$0xf] %vm8, %v7
    %s11 = scalar_lea.vmem [#allocation0], 64
    %12 = vst.msk [vmem:[%s11] ss:$8 sm:$0xf0] %vm8, %v7
    %s13 = scalar_lea.vmem %s0, 16
    %v14 = vld [vmem:[%s13] sm:$0xff]
    %vm15 = vcmask 31744
    %s16 = scalar_lea.vmem [#allocation0], 128
    %17 = vst.msk [vmem:[%s16] ss:$8 sm:$0xf] %vm15, %v14
    %s18 = scalar_lea.vmem [#allocation0], 128
    %19 = vst.msk [vmem:[%s18] ss:$8 sm:$0xf0] %vm15, %v14
    %s20 = scalar_lea.vmem %s0, 24
    %v21 = vld [vmem:[%s20] sm:$0xff]
    %vm22 = vcmask 31744
    %s23 = scalar_lea.vmem [#allocation0], 192
    %24 = vst.msk [vmem:[%s23] ss:$8 sm:$0xf] %vm22, %v21
    %s25 = scalar_lea.vmem [#allocation0], 192
    %26 = vst.msk [vmem:[%s25] ss:$8 sm:$0xf0] %vm22, %v21
    %s27 = scalar_lea.vmem %s0, 32
    %v28 = vld [vmem:[%s27] sm:$0xff]
    %vm29 = vcmask 31744
    %s30 = scalar_lea.vmem [#allocation0], 256
    %31 = vst.msk [vmem:[%s30] ss:$8 sm:$0xf] %vm29, %v28
    %s32 = scalar_lea.vmem [#allocation0], 256
    %33 = vst.msk [vmem:[%s32] ss:$8 sm:$0xf0] %vm29, %v28
    %s34 = scalar_lea.vmem %s0, 40
    %v35 = vld [vmem:[%s34] sm:$0xff]
    %vm36 = vcmask 31744
    %s37 = scalar_lea.vmem [#allocation0], 320
    %38 = vst.msk [vmem:[%s37] ss:$8 sm:$0xf] %vm36, %v35
    %s39 = scalar_lea.vmem [#allocation0], 320
    %40 = vst.msk [vmem:[%s39] ss:$8 sm:$0xf0] %vm36, %v35
    %v41 = vld [vmem:[%s0] sm:$0xff]
    %42 = vrot.lane.b32.xlu0 %v41, 124
    %v43 = vpop.permute.xlu0 %42
    %vm44 = vcmask 31744
    %s45 = scalar_lea.vmem [#allocation0], 1
    %46 = vst.msk [vmem:[%s45] ss:$8 sm:$0xf] %vm44, %v43
    %s47 = scalar_lea.vmem [#allocation0], 1
    %48 = vst.msk [vmem:[%s47] ss:$8 sm:$0xf0] %vm44, %v43
    %s49 = scalar_lea.vmem %s0, 8
    %v50 = vld [vmem:[%s49] sm:$0xff]
    %51 = vrot.lane.b32.xlu0 %v50, 124
    %v52 = vpop.permute.xlu0 %51
    %vm53 = vcmask 31744
    %s54 = scalar_lea.vmem [#allocation0], 65
    %55 = vst.msk [vmem:[%s54] ss:$8 sm:$0xf] %vm53, %v52
    %s56 = scalar_lea.vmem [#allocation0], 65
    %57 = vst.msk [vmem:[%s56] ss:$8 sm:$0xf0] %vm53, %v52
    %s58 = scalar_lea.vmem %s0, 16
    %v59 = vld [vmem:[%s58] sm:$0xff]
    %60 = vrot.lane.b32.xlu0 %v59, 124
    %v61 = vpop.permute.xlu0 %60
    %vm62 = vcmask 31744
    %s63 = scalar_lea.vmem [#allocation0], 129
    %64 = vst.msk [vmem:[%s63] ss:$8 sm:$0xf] %vm62, %v61
    %s65 = scalar_lea.vmem [#allocation0], 129
    %66 = vst.msk [vmem:[%s65] ss:$8 sm:$0xf0] %vm62, %v61
    %s67 = scalar_lea.vmem %s0, 24
    %v68 = vld [vmem:[%s67] sm:$0xff]
    %69 = vrot.lane.b32.xlu0 %v68, 124
    %v70 = vpop.permute.xlu0 %69
    %vm71 = vcmask 31744
    %s72 = scalar_lea.vmem [#allocation0], 193
    %73 = vst.msk [vmem:[%s72] ss:$8 sm:$0xf] %vm71, %v70
    %s74 = scalar_lea.vmem [#allocation0], 193
    %75 = vst.msk [vmem:[%s74] ss:$8 sm:$0xf0] %vm71, %v70
    %s76 = scalar_lea.vmem %s0, 32
    %v77 = vld [vmem:[%s76] sm:$0xff]
    %78 = vrot.lane.b32.xlu0 %v77, 124
    %v79 = vpop.permute.xlu0 %78
    %vm80 = vcmask 31744
    %s81 = scalar_lea.vmem [#allocation0], 257
    %82 = vst.msk [vmem:[%s81] ss:$8 sm:$0xf] %vm80, %v79
    %s83 = scalar_lea.vmem [#allocation0], 257
    %84 = vst.msk [vmem:[%s83] ss:$8 sm:$0xf0] %vm80, %v79
    %s85 = scalar_lea.vmem %s0, 40
    %v86 = vld [vmem:[%s85] sm:$0xff]
    %87 = vrot.lane.b32.xlu0 %v86, 124
    %v88 = vpop.permute.xlu0 %87
    %vm89 = vcmask 31744
    %s90 = scalar_lea.vmem [#allocation0], 321
    %91 = vst.msk [vmem:[%s90] ss:$8 sm:$0xf] %vm89, %v88
    %s92 = scalar_lea.vmem [#allocation0], 321
    %93 = vst.msk [vmem:[%s92] ss:$8 sm:$0xf0] %vm89, %v88
    %v94 = vld [vmem:[%s0] sm:$0xff]
    %95 = vrot.lane.b32.xlu0 %v94, 120
    %v96 = vpop.permute.xlu0 %95
    %vm97 = vcmask 31744
    %s98 = scalar_lea.vmem [#allocation0], 2
    %99 = vst.msk [vmem:[%s98] ss:$8 sm:$0xf] %vm97, %v96
    %s100 = scalar_lea.vmem [#allocation0], 2
    %101 = vst.msk [vmem:[%s100] ss:$8 sm:$0xf0] %vm97, %v96
    %s102 = scalar_lea.vmem %s0, 8
    %v103 = vld [vmem:[%s102] sm:$0xff]
    %104 = vrot.lane.b32.xlu0 %v103, 120
    %v105 = vpop.permute.xlu0 %104
    %vm106 = vcmask 31744
    %s107 = scalar_lea.vmem [#allocation0], 66
    %108 = vst.msk [vmem:[%s107] ss:$8 sm:$0xf] %vm106, %v105
    %s109 = scalar_lea.vmem [#allocation0], 66
    %110 = vst.msk [vmem:[%s109] ss:$8 sm:$0xf0] %vm106, %v105
    %s111 = scalar_lea.vmem %s0, 16
    %v112 = vld [vmem:[%s111] sm:$0xff]
    %113 = vrot.lane.b32.xlu0 %v112, 120
    %v114 = vpop.permute.xlu0 %113
    %vm115 = vcmask 31744
    %s116 = scalar_lea.vmem [#allocation0], 130
    %117 = vst.msk [vmem:[%s116] ss:$8 sm:$0xf] %vm115, %v114
    %s118 = scalar_lea.vmem [#allocation0], 130
    %119 = vst.msk [vmem:[%s118] ss:$8 sm:$0xf0] %vm115, %v114
    %s120 = scalar_lea.vmem %s0, 24
    %v121 = vld [vmem:[%s120] sm:$0xff]
    %122 = vrot.lane.b32.xlu0 %v121, 120
    %v123 = vpop.permute.xlu0 %122
    %vm124 = vcmask 31744
    %s125 = scalar_lea.vmem [#allocation0], 194
    %126 = vst.msk [vmem:[%s125] ss:$8 sm:$0xf] %vm124, %v123
    %s127 = scalar_lea.vmem [#allocation0], 194
    %128 = vst.msk [vmem:[%s127] ss:$8 sm:$0xf0] %vm124, %v123
    %s129 = scalar_lea.vmem %s0, 32
    %v130 = vld [vmem:[%s129] sm:$0xff]
    %131 = vrot.lane.b32.xlu0 %v130, 120
    %v132 = vpop.permute.xlu0 %131
    %vm133 = vcmask 31744
    %s134 = scalar_lea.vmem [#allocation0], 258
    %135 = vst.msk [vmem:[%s134] ss:$8 sm:$0xf] %vm133, %v132
    %s136 = scalar_lea.vmem [#allocation0], 258
    %137 = vst.msk [vmem:[%s136] ss:$8 sm:$0xf0] %vm133, %v132
    %s138 = scalar_lea.vmem %s0, 40
    %v139 = vld [vmem:[%s138] sm:$0xff]
    %140 = vrot.lane.b32.xlu0 %v139, 120
    %v141 = vpop.permute.xlu0 %140
    %vm142 = vcmask 31744
    %s143 = scalar_lea.vmem [#allocation0], 322
    %144 = vst.msk [vmem:[%s143] ss:$8 sm:$0xf] %vm142, %v141
    %s145 = scalar_lea.vmem [#allocation0], 322
    %146 = vst.msk [vmem:[%s145] ss:$8 sm:$0xf0] %vm142, %v141
    %v147 = vld [vmem:[%s0] sm:$0xff]
    %148 = vrot.lane.b32.xlu0 %v147, 116
    %v149 = vpop.permute.xlu0 %148
    %vm150 = vcmask 31744
    %s151 = scalar_lea.vmem [#allocation0], 3
    %152 = vst.msk [vmem:[%s151] ss:$8 sm:$0xf] %vm150, %v149
    %s153 = scalar_lea.vmem [#allocation0], 3
    %154 = vst.msk [vmem:[%s153] ss:$8 sm:$0xf0] %vm150, %v149
    %s155 = scalar_lea.vmem %s0, 8
    %v156 = vld [vmem:[%s155] sm:$0xff]
    %157 = vrot.lane.b32.xlu0 %v156, 116
    %v158 = vpop.permute.xlu0 %157
    %vm159 = vcmask 31744
    %s160 = scalar_lea.vmem [#allocation0], 67
    %161 = vst.msk [vmem:[%s160] ss:$8 sm:$0xf] %vm159, %v158
    %s162 = scalar_lea.vmem [#allocation0], 67
    %163 = vst.msk [vmem:[%s162] ss:$8 sm:$0xf0] %vm159, %v158
    %s164 = scalar_lea.vmem %s0, 16
    %v165 = vld [vmem:[%s164] sm:$0xff]
    %166 = vrot.lane.b32.xlu0 %v165, 116
    %v167 = vpop.permute.xlu0 %166
    %vm168 = vcmask 31744
    %s169 = scalar_lea.vmem [#allocation0], 131
    %170 = vst.msk [vmem:[%s169] ss:$8 sm:$0xf] %vm168, %v167
    %s171 = scalar_lea.vmem [#allocation0], 131
    %172 = vst.msk [vmem:[%s171] ss:$8 sm:$0xf0] %vm168, %v167
    %s173 = scalar_lea.vmem %s0, 24
    %v174 = vld [vmem:[%s173] sm:$0xff]
    %175 = vrot.lane.b32.xlu0 %v174, 116
    %v176 = vpop.permute.xlu0 %175
    %vm177 = vcmask 31744
    %s178 = scalar_lea.vmem [#allocation0], 195
    %179 = vst.msk [vmem:[%s178] ss:$8 sm:$0xf] %vm177, %v176
    %s180 = scalar_lea.vmem [#allocation0], 195
    %181 = vst.msk [vmem:[%s180] ss:$8 sm:$0xf0] %vm177, %v176
    %s182 = scalar_lea.vmem %s0, 32
    %v183 = vld [vmem:[%s182] sm:$0xff]
    %184 = vrot.lane.b32.xlu0 %v183, 116
    %v185 = vpop.permute.xlu0 %184
    %vm186 = vcmask 31744
    %s187 = scalar_lea.vmem [#allocation0], 259
    %188 = vst.msk [vmem:[%s187] ss:$8 sm:$0xf] %vm186, %v185
    %s189 = scalar_lea.vmem [#allocation0], 259
    %190 = vst.msk [vmem:[%s189] ss:$8 sm:$0xf0] %vm186, %v185
    %s191 = scalar_lea.vmem %s0, 40
    %v192 = vld [vmem:[%s191] sm:$0xff]
    %193 = vrot.lane.b32.xlu0 %v192, 116
    %v194 = vpop.permute.xlu0 %193
    %vm195 = vcmask 31744
    %s196 = scalar_lea.vmem [#allocation0], 323
    %197 = vst.msk [vmem:[%s196] ss:$8 sm:$0xf] %vm195, %v194
    %s198 = scalar_lea.vmem [#allocation0], 323
    %199 = vst.msk [vmem:[%s198] ss:$8 sm:$0xf0] %vm195, %v194
    %s201 = sshllo.u32 0, 4
    %v203 = vld [vmem:[#allocation0] sm:%s201]
    %s204 = sshllo.u32 0, 4
    %205 = vst [vmem:[%s1] sm:%s204] %v203
    %s206 = scalar_lea.vmem [#allocation0], 8
    %v207 = vld [vmem:[%s206] sm:%s201]
    %s208 = sshllo.u32 0, 4
    %s209 = scalar_lea.vmem %s1, 4
    %210 = vst [vmem:[%s209] sm:%s208] %v207
    %s211 = scalar_lea.vmem [#allocation0], 16
    %v212 = vld [vmem:[%s211] sm:%s201]
    %s213 = sshllo.u32 0, 4
    %s214 = smul.addr 4, 2
    %s215 = scalar_lea.vmem %s1, %s214
    %216 = vst [vmem:[%s215] sm:%s213] %v212
    %s217 = scalar_lea.vmem [#allocation0], 24
    %v218 = vld [vmem:[%s217] sm:%s201]
    %s219 = sshllo.u32 0, 4
    %s220 = smul.addr 4, 3
    %s221 = scalar_lea.vmem %s1, %s220
    %222 = vst [vmem:[%s221] sm:%s219] %v218
    %s223 = scalar_lea.vmem [#allocation0], 32
    %v224 = vld [vmem:[%s223] sm:%s201]
    %s225 = sshllo.u32 0, 4
    %s226 = smul.addr 4, 4
    %s227 = scalar_lea.vmem %s1, %s226
    %228 = vst [vmem:[%s227] sm:%s225] %v224
    %s229 = scalar_lea.vmem [#allocation0], 40
    %v230 = vld [vmem:[%s229] sm:%s201]
    %s231 = sshllo.u32 0, 4
    %s232 = smul.addr 4, 5
    %s233 = scalar_lea.vmem %s1, %s232
    %234 = vst [vmem:[%s233] sm:%s231] %v230
    %s235 = scalar_lea.vmem [#allocation0], 48
    %v236 = vld [vmem:[%s235] sm:%s201]
    %s237 = sshllo.u32 0, 4
    %s238 = smul.addr 4, 6
    %s239 = scalar_lea.vmem %s1, %s238
    %240 = vst [vmem:[%s239] sm:%s237] %v236
    %s241 = scalar_lea.vmem [#allocation0], 56
    %v242 = vld [vmem:[%s241] sm:%s201]
    %s243 = sshllo.u32 0, 4
    %s244 = smul.addr 4, 7
    %s245 = scalar_lea.vmem %s1, %s244
    %246 = vst [vmem:[%s245] sm:%s243] %v242
    %s247 = scalar_lea.vmem [#allocation0], 64
    %v248 = vld [vmem:[%s247] sm:%s201]
    %s249 = sshllo.u32 0, 4
    %s250 = smul.addr 4, 8
    %s251 = scalar_lea.vmem %s1, %s250
    %252 = vst [vmem:[%s251] sm:%s249] %v248
    %s253 = scalar_lea.vmem [#allocation0], 72
    %v254 = vld [vmem:[%s253] sm:%s201]
    %s255 = sshllo.u32 0, 4
    %s256 = smul.addr 4, 9
    %s257 = scalar_lea.vmem %s1, %s256
    %258 = vst [vmem:[%s257] sm:%s255] %v254
    %s259 = scalar_lea.vmem [#allocation0], 80
    %v260 = vld [vmem:[%s259] sm:%s201]
    %s261 = sshllo.u32 0, 4
    %s262 = smul.addr 4, 10
    %s263 = scalar_lea.vmem %s1, %s262
    %264 = vst [vmem:[%s263] sm:%s261] %v260
    %s265 = scalar_lea.vmem [#allocation0], 88
    %v266 = vld [vmem:[%s265] sm:%s201]
    %s267 = sshllo.u32 0, 4
    %s268 = smul.addr 4, 11
    %s269 = scalar_lea.vmem %s1, %s268
    %270 = vst [vmem:[%s269] sm:%s267] %v266
    %s271 = scalar_lea.vmem [#allocation0], 96
    %v272 = vld [vmem:[%s271] sm:%s201]
    %s273 = sshllo.u32 0, 4
    %s274 = smul.addr 4, 12
    %s275 = scalar_lea.vmem %s1, %s274
    %276 = vst [vmem:[%s275] sm:%s273] %v272
    %s277 = scalar_lea.vmem [#allocation0], 104
    %v278 = vld [vmem:[%s277] sm:%s201]
    %s279 = sshllo.u32 0, 4
    %s280 = smul.addr 4, 13
    %s281 = scalar_lea.vmem %s1, %s280
    %282 = vst [vmem:[%s281] sm:%s279] %v278
    %s283 = scalar_lea.vmem [#allocation0], 112
    %v284 = vld [vmem:[%s283] sm:%s201]
    %s285 = sshllo.u32 0, 4
    %s286 = smul.addr 4, 14
    %s287 = scalar_lea.vmem %s1, %s286
    %288 = vst [vmem:[%s287] sm:%s285] %v284
    %s289 = scalar_lea.vmem [#allocation0], 120
    %v290 = vld [vmem:[%s289] sm:%s201]
    %s291 = sshllo.u32 0, 4
    %s292 = smul.addr 4, 15
    %s293 = scalar_lea.vmem %s1, %s292
    %294 = vst [vmem:[%s293] sm:%s291] %v290
    %s295 = scalar_lea.vmem [#allocation0], 128
    %v296 = vld [vmem:[%s295] sm:%s201]
    %s297 = sshllo.u32 0, 4
    %s298 = smul.addr 4, 16
    %s299 = scalar_lea.vmem %s1, %s298
    %300 = vst [vmem:[%s299] sm:%s297] %v296
    %s301 = scalar_lea.vmem [#allocation0], 136
    %v302 = vld [vmem:[%s301] sm:%s201]
    %s303 = sshllo.u32 0, 4
    %s304 = smul.addr 4, 17
    %s305 = scalar_lea.vmem %s1, %s304
    %306 = vst [vmem:[%s305] sm:%s303] %v302
    %s307 = scalar_lea.vmem [#allocation0], 144
    %v308 = vld [vmem:[%s307] sm:%s201]
    %s309 = sshllo.u32 0, 4
    %s310 = smul.addr 4, 18
    %s311 = scalar_lea.vmem %s1, %s310
    %312 = vst [vmem:[%s311] sm:%s309] %v308
    %s313 = scalar_lea.vmem [#allocation0], 152
    %v314 = vld [vmem:[%s313] sm:%s201]
    %s315 = sshllo.u32 0, 4
    %s316 = smul.addr 4, 19
    %s317 = scalar_lea.vmem %s1, %s316
    %318 = vst [vmem:[%s317] sm:%s315] %v314
    %s319 = scalar_lea.vmem [#allocation0], 160
    %v320 = vld [vmem:[%s319] sm:%s201]
    %s321 = sshllo.u32 0, 4
    %s322 = smul.addr 4, 20
    %s323 = scalar_lea.vmem %s1, %s322
    %324 = vst [vmem:[%s323] sm:%s321] %v320
    %s325 = scalar_lea.vmem [#allocation0], 168
    %v326 = vld [vmem:[%s325] sm:%s201]
    %s327 = sshllo.u32 0, 4
    %s328 = smul.addr 4, 21
    %s329 = scalar_lea.vmem %s1, %s328
    %330 = vst [vmem:[%s329] sm:%s327] %v326
    %s331 = scalar_lea.vmem [#allocation0], 176
    %v332 = vld [vmem:[%s331] sm:%s201]
    %s333 = sshllo.u32 0, 4
    %s334 = smul.addr 4, 22
    %s335 = scalar_lea.vmem %s1, %s334
    %336 = vst [vmem:[%s335] sm:%s333] %v332
    %s337 = scalar_lea.vmem [#allocation0], 184
    %v338 = vld [vmem:[%s337] sm:%s201]
    %s339 = sshllo.u32 0, 4
    %s340 = smul.addr 4, 23
    %s341 = scalar_lea.vmem %s1, %s340
    %342 = vst [vmem:[%s341] sm:%s339] %v338
    %s343 = scalar_lea.vmem [#allocation0], 192
    %v344 = vld [vmem:[%s343] sm:%s201]
    %s345 = sshllo.u32 0, 4
    %s346 = smul.addr 4, 24
    %s347 = scalar_lea.vmem %s1, %s346
    %348 = vst [vmem:[%s347] sm:%s345] %v344
    %s349 = scalar_lea.vmem [#allocation0], 200
    %v350 = vld [vmem:[%s349] sm:%s201]
    %s351 = sshllo.u32 0, 4
    %s352 = smul.addr 4, 25
    %s353 = scalar_lea.vmem %s1, %s352
    %354 = vst [vmem:[%s353] sm:%s351] %v350
    %s355 = scalar_lea.vmem [#allocation0], 208
    %v356 = vld [vmem:[%s355] sm:%s201]
    %s357 = sshllo.u32 0, 4
    %s358 = smul.addr 4, 26
    %s359 = scalar_lea.vmem %s1, %s358
    %360 = vst [vmem:[%s359] sm:%s357] %v356
    %s361 = scalar_lea.vmem [#allocation0], 216
    %v362 = vld [vmem:[%s361] sm:%s201]
    %s363 = sshllo.u32 0, 4
    %s364 = smul.addr 4, 27
    %s365 = scalar_lea.vmem %s1, %s364
    %366 = vst [vmem:[%s365] sm:%s363] %v362
    %s367 = scalar_lea.vmem [#allocation0], 224
    %v368 = vld [vmem:[%s367] sm:%s201]
    %s369 = sshllo.u32 0, 4
    %s370 = smul.addr 4, 28
    %s371 = scalar_lea.vmem %s1, %s370
    %372 = vst [vmem:[%s371] sm:%s369] %v368
    %s373 = scalar_lea.vmem [#allocation0], 232
    %v374 = vld [vmem:[%s373] sm:%s201]
    %s375 = sshllo.u32 0, 4
    %s376 = smul.addr 4, 29
    %s377 = scalar_lea.vmem %s1, %s376
    %378 = vst [vmem:[%s377] sm:%s375] %v374
    %s379 = scalar_lea.vmem [#allocation0], 240
    %v380 = vld [vmem:[%s379] sm:%s201]
    %s381 = sshllo.u32 0, 4
    %s382 = smul.addr 4, 30
    %s383 = scalar_lea.vmem %s1, %s382
    %384 = vst [vmem:[%s383] sm:%s381] %v380
    %s385 = scalar_lea.vmem [#allocation0], 248
    %v386 = vld [vmem:[%s385] sm:%s201]
    %s387 = sshllo.u32 0, 4
    %s388 = smul.addr 4, 31
    %s389 = scalar_lea.vmem %s1, %s388
    %390 = vst [vmem:[%s389] sm:%s387] %v386
    %s391 = scalar_lea.vmem [#allocation0], 256
    %v392 = vld [vmem:[%s391] sm:%s201]
    %s393 = sshllo.u32 0, 4
    %s394 = smul.addr 4, 32
    %s395 = scalar_lea.vmem %s1, %s394
    %396 = vst [vmem:[%s395] sm:%s393] %v392
    %s397 = scalar_lea.vmem [#allocation0], 264
    %v398 = vld [vmem:[%s397] sm:%s201]
    %s399 = sshllo.u32 0, 4
    %s400 = smul.addr 4, 33
    %s401 = scalar_lea.vmem %s1, %s400
    %402 = vst [vmem:[%s401] sm:%s399] %v398
    %s403 = scalar_lea.vmem [#allocation0], 272
    %v404 = vld [vmem:[%s403] sm:%s201]
    %s405 = sshllo.u32 0, 4
    %s406 = smul.addr 4, 34
    %s407 = scalar_lea.vmem %s1, %s406
    %408 = vst [vmem:[%s407] sm:%s405] %v404
    %s409 = scalar_lea.vmem [#allocation0], 280
    %v410 = vld [vmem:[%s409] sm:%s201]
    %s411 = sshllo.u32 0, 4
    %s412 = smul.addr 4, 35
    %s413 = scalar_lea.vmem %s1, %s412
    %414 = vst [vmem:[%s413] sm:%s411] %v410
    %s415 = scalar_lea.vmem [#allocation0], 288
    %v416 = vld [vmem:[%s415] sm:%s201]
    %s417 = sshllo.u32 0, 4
    %s418 = smul.addr 4, 36
    %s419 = scalar_lea.vmem %s1, %s418
    %420 = vst [vmem:[%s419] sm:%s417] %v416
    %s421 = scalar_lea.vmem [#allocation0], 296
    %v422 = vld [vmem:[%s421] sm:%s201]
    %s423 = sshllo.u32 0, 4
    %s424 = smul.addr 4, 37
    %s425 = scalar_lea.vmem %s1, %s424
    %426 = vst [vmem:[%s425] sm:%s423] %v422
    %s427 = scalar_lea.vmem [#allocation0], 304
    %v428 = vld [vmem:[%s427] sm:%s201]
    %s429 = sshllo.u32 0, 4
    %s430 = smul.addr 4, 38
    %s431 = scalar_lea.vmem %s1, %s430
    %432 = vst [vmem:[%s431] sm:%s429] %v428
    %s433 = scalar_lea.vmem [#allocation0], 312
    %v434 = vld [vmem:[%s433] sm:%s201]
    %s435 = sshllo.u32 0, 4
    %s436 = smul.addr 4, 39
    %s437 = scalar_lea.vmem %s1, %s436
    %438 = vst [vmem:[%s437] sm:%s435] %v434
    %s439 = scalar_lea.vmem [#allocation0], 320
    %v440 = vld [vmem:[%s439] sm:%s201]
    %s441 = sshllo.u32 0, 4
    %s442 = smul.addr 4, 40
    %s443 = scalar_lea.vmem %s1, %s442
    %444 = vst [vmem:[%s443] sm:%s441] %v440
    %s445 = scalar_lea.vmem [#allocation0], 328
    %v446 = vld [vmem:[%s445] sm:%s201]
    %s447 = sshllo.u32 0, 4
    %s448 = smul.addr 4, 41
    %s449 = scalar_lea.vmem %s1, %s448
    %450 = vst [vmem:[%s449] sm:%s447] %v446
    %s451 = scalar_lea.vmem [#allocation0], 336
    %v452 = vld [vmem:[%s451] sm:%s201]
    %s453 = sshllo.u32 0, 4
    %s454 = smul.addr 4, 42
    %s455 = scalar_lea.vmem %s1, %s454
    %456 = vst [vmem:[%s455] sm:%s453] %v452
    %s457 = scalar_lea.vmem [#allocation0], 344
    %v458 = vld [vmem:[%s457] sm:%s201]
    %s459 = sshllo.u32 0, 4
    %s460 = smul.addr 4, 43
    %s461 = scalar_lea.vmem %s1, %s460
    %462 = vst [vmem:[%s461] sm:%s459] %v458
    %s463 = scalar_lea.vmem [#allocation0], 352
    %v464 = vld [vmem:[%s463] sm:%s201]
    %s465 = sshllo.u32 0, 4
    %s466 = smul.addr 4, 44
    %s467 = scalar_lea.vmem %s1, %s466
    %468 = vst [vmem:[%s467] sm:%s465] %v464
    %s469 = scalar_lea.vmem [#allocation0], 360
    %v470 = vld [vmem:[%s469] sm:%s201]
    %s471 = sshllo.u32 0, 4
    %s472 = smul.addr 4, 45
    %s473 = scalar_lea.vmem %s1, %s472
    %474 = vst [vmem:[%s473] sm:%s471] %v470
    %s475 = scalar_lea.vmem [#allocation0], 368
    %v476 = vld [vmem:[%s475] sm:%s201]
    %s477 = sshllo.u32 0, 4
    %s478 = smul.addr 4, 46
    %s479 = scalar_lea.vmem %s1, %s478
    %480 = vst [vmem:[%s479] sm:%s477] %v476
    %s481 = scalar_lea.vmem [#allocation0], 376
    %v482 = vld [vmem:[%s481] sm:%s201]
    %s483 = sshllo.u32 0, 4
    %s484 = smul.addr 4, 47
    %s485 = scalar_lea.vmem %s1, %s484
    %486 = vst [vmem:[%s485] sm:%s483] %v482

// kernel: medsam_forward.1
$region0: #{medsam_forward.1}
  #allocation0 [shape = 'u32[]', space=smem, size = 0x4, offset = 0x4, fixed_abs, tag = 'smem constant byte address 0x4 - core index']
  #allocation1 [shape = 'u32[144,128]{1,0:T(1,128)}', space=vmem, size = 0x12000, scoped, tag = 'internal scratch']
  %s0 = inlined_call_operand.vmem [shape: f32[16,48], index: 0, kind: input, shape index: {}]
  %s1 = inlined_call_operand.vmem [shape: f32[408,128], index: 1, kind: input, shape index: {}]
  %s2 = inlined_call_operand.vmem [shape: f32[24,128], index: 2, kind: input, shape index: {}]
  %s3 = inlined_call_operand.vmem [shape: s32[16,16], index: 3, kind: output, shape index: {}]
  %s4 = sld [smem:[#allocation0]]
  $region22: #{medsam_forward.1} parent=0
    _
  %s6 = ssub.s32 1, %s4
  %s7 = scalar_select 0, %s6, %s4
  // Predicated region
  $region2: #{medsam_forward.1} parent=0 // pred_check
    _
  $region3: #{medsam_forward.1} parent=0 // pred_check_branch
    %9 = sbr.rel (0) target = $region5
  $region4: #{medsam_forward.1} parent=0 // pred_region
    _
  $region5: #{medsam_forward.1} parent=0 // pred_fallthru
    _
  // Predicated region
  $region6: #{medsam_forward.1} parent=0 // pred_check
    _
  $region7: #{medsam_forward.1} parent=0 // pred_check_branch
    %11 = sbr.rel (0) target = $region9
  $region8: #{medsam_forward.1} parent=0 // pred_region
    _
  $region9: #{medsam_forward.1} parent=0 // pred_fallthru
    _
  // Predicated region
  $region10: #{medsam_forward.1} parent=0 // pred_check
    _
  $region11: #{medsam_forward.1} parent=0 // pred_check_branch
    %13 = sbr.rel (0) target = $region13
  $region12: #{medsam_forward.1} parent=0 // pred_region
    _
  $region13: #{medsam_forward.1} parent=0 // pred_fallthru
    _
  %v15 = vld [vmem:[%s2] sm:$0xff]
  %v16 = vld [vmem:[%s2 + $0x8] sm:$0xff]
  %v17 = vld [vmem:[%s2 + $0x10] sm:$0xff]
  %v18 = vld [vmem:[%s0] sm:$0xff]
  %v19 = vld [vmem:[%s0 + $0x8] sm:$0xff]
  %v20 = vld [vmem:[%s1] sm:$0xff]
  %v21 = vld [vmem:[%s1 + $0x8] sm:$0xff]
  %v22 = vld [vmem:[%s1 + $0x10] sm:$0xff]
  %v23 = vld [vmem:[%s1 + $0x18] sm:$0xff]
  %v24 = vld [vmem:[%s1 + $0x20] sm:$0xff]
  %v25 = vld [vmem:[%s1 + $0x28] sm:$0xff]
  %v26 = vpack.c.bf16 %v19, %v18
  %v27 = vpack.c.bf16 %v21, %v20
  %v28 = vpack.c.bf16 %v23, %v22
  %v29 = vpack.c.bf16 %v25, %v24
  %v30 = vlaneseq
  %v31 = vshrl.u32 %v30, 7
  %v32 = vsub.s32 0, %v31
  %v33 = vrot.slane %v15, %v32
  %vm34 = vcmask 392192
  %v36 = vsel %vm34, %v26, 0
  %38 = vmatprep.subr.bf16.mxu0 0
  %39 = vmatpush1.bf16.msra.mxu0 %v27
  %40 = vmatprep.subr.bf16.mxu0 0
  %41 = vmatpush1.bf16.msra.mxu0 %v28
  %42 = vmatprep.subr.bf16.mxu0 0
  %43 = vmatpush1.bf16.msra.mxu0 %v29
  %44 = vmatprep.subr.bf16.mxu0 0
  %45 = vmatpush1.bf16.msra.mxu0 0
  %46 = vmatprep.subr.bf16.mxu0 0
  %47 = vmatpush1.bf16.msra.mxu0 0
  %48 = vmatprep.subr.bf16.mxu0 0
  %49 = vmatpush1.bf16.msra.mxu0 0
  %50 = vmatprep.subr.bf16.mxu0 0
  %51 = vmatpush1.bf16.msra.mxu0 0
  %52 = vmatprep.subr.bf16.mxu0 0
  %53 = vmatpush1.bf16.msra.mxu0 0
  %54 = vmatprep.subr.bf16.mxu0 0
  %55 = vmatpush1.bf16.msra.mxu0 0
  %56 = vmatprep.subr.bf16.mxu0 0
  %57 = vmatpush1.bf16.msra.mxu0 0
  %58 = vmatprep.subr.bf16.mxu0 0
  %59 = vmatpush1.bf16.msra.mxu0 0
  %60 = vmatprep.subr.bf16.mxu0 0
  %61 = vmatpush1.bf16.msra.mxu0 0
  %62 = vmatprep.subr.bf16.mxu0 0
  %63 = vmatpush1.bf16.msra.mxu0 0
  %64 = vmatprep.subr.bf16.mxu0 0
  %65 = vmatpush1.bf16.msra.mxu0 0
  %66 = vmatprep.subr.bf16.mxu0 0
  %67 = vmatpush1.bf16.msra.mxu0 0
  %68 = vmatprep.subr.bf16.mxu0 0
  %69 = vmatpush1.bf16.msra.mxu0 0
  %70 = vmatprep.mubr.bf16.mxu0 0
  %71 = vmatmul.mubr.bf16.gmra.mrb[0].mxu0 %v36
  %v72 = vpop.f32.mrb[0].mxu0
  %v73 = vadd.f32 %v33, %v72
  %v74 = vpop.f32.mrb[0].mxu0
  %v75 = vpop.f32.mrb[0].mxu0
  %v76 = vadd.f32 %v33, %v75
  %v77 = vpop.f32.mrb[0].mxu0
  %78 = vdwg.mxu0
  %v79 = vld [vmem:[%s1 + $0x30] sm:$0xff]
  %v80 = vld [vmem:[%s1 + $0x38] sm:$0xff]
  %v81 = vadd.f32 %v73, %v79
  %v82 = vadd.f32 %v76, %v80
  %vm83 = vcmask 261120
  %v84 = vsel %vm83, %v81, 0.0
  %85 = vadd.xlane.f32.xlu0 %v84
  %v86 = vpop.xlane.xlu0 %85
  %v87 = vsel %vm83, %v82, 0.0
  %88 = vadd.xlane.f32.xlu0 %v87
  %v89 = vpop.xlane.xlu0 %88
  %v90 = vrcp.pop 32.0
  %v91 = vmul.f32 %v86, %v90
  %v92 = vmul.f32 %v89, %v90
  %v93 = vsub.f32 %v81, %v91
  %v94 = vsub.f32 %v82, %v92
  %v95 = vmul.f32 %v93, %v93
  %v96 = vmul.f32 %v94, %v94
  %v97 = vsel %vm83, %v95, 0.0
  %98 = vadd.xlane.f32.xlu0 %v97
  %v99 = vpop.xlane.xlu0 %98
  %v100 = vsel %vm83, %v96, 0.0
  %101 = vadd.xlane.f32.xlu0 %v100
  %v102 = vpop.xlane.xlu0 %101
  %v103 = vmul.f32 %v99, %v90
  %v104 = vmul.f32 %v102, %v90
  %v105 = vadd.f32 %v103, 1e-06
  %v106 = vadd.f32 %v104, 1e-06
  %v107 = vrsqrt.pop %v105
  %v108 = vrsqrt.pop %v106
  %v109 = vmul.f32 %v93, %v107
  %v110 = vmul.f32 %v94, %v108
  %v111 = vlaneseq
  %v112 = vshrl.u32 %v111, 7
  %v113 = vsub.s32 1, %v112
  %v114 = vrot.slane %v15, %v113
  %v115 = vmul.f32 %v109, %v114
  %v116 = vmul.f32 %v110, %v114
  %v117 = vlaneseq
  %v118 = vshrl.u32 %v117, 7
  %v119 = vsub.s32 2, %v118
  %v120 = vrot.slane %v15, %v119
  %v121 = vadd.f32 %v115, %v120
  %v122 = vadd.f32 %v116, %v120
  %v123 = vld [vmem:[%s1 + $0x40] sm:$0xff]
  %v124 = vld [vmem:[%s1 + $0x48] sm:$0xff]
  %v125 = vld [vmem:[%s1 + $0x50] sm:$0xff]
  %v126 = vld [vmem:[%s1 + $0x58] sm:$0xff]
  %v127 = vpack.c.bf16 %v122, %v121
  %v128 = vpack.c.bf16 %v124, %v123
  %v129 = vpack.c.bf16 %v126, %v125
  %v130 = vlaneseq
  %v131 = vshrl.u32 %v130, 7
  %v132 = vsub.s32 3, %v131
  %v133 = vrot.slane %v15, %v132
  %v135 = vsel %vm83, %v127, 0
  %137 = vmatprep.subr.bf16.mxu0 0
  %138 = vmatpush1.bf16.msra.mxu0 %v128
  %139 = vmatprep.subr.bf16.mxu0 0
  %140 = vmatpush1.bf16.msra.mxu0 %v129
  %141 = vmatprep.subr.bf16.mxu0 0
  %142 = vmatpush1.bf16.msra.mxu0 0
  %143 = vmatprep.subr.bf16.mxu0 0
  %144 = vmatpush1.bf16.msra.mxu0 0
  %145 = vmatprep.subr.bf16.mxu0 0
  %146 = vmatpush1.bf16.msra.mxu0 0
  %147 = vmatprep.subr.bf16.mxu0 0
  %148 = vmatpush1.bf16.msra.mxu0 0
  %149 = vmatprep.subr.bf16.mxu0 0
  %150 = vmatpush1.bf16.msra.mxu0 0
  %151 = vmatprep.subr.bf16.mxu0 0
  %152 = vmatpush1.bf16.msra.mxu0 0
  %153 = vmatprep.subr.bf16.mxu0 0
  %154 = vmatpush1.bf16.msra.mxu0 0
  %155 = vmatprep.subr.bf16.mxu0 0
  %156 = vmatpush1.bf16.msra.mxu0 0
  %157 = vmatprep.subr.bf16.mxu0 0
  %158 = vmatpush1.bf16.msra.mxu0 0
  %159 = vmatprep.subr.bf16.mxu0 0
  %160 = vmatpush1.bf16.msra.mxu0 0
  %161 = vmatprep.subr.bf16.mxu0 0
  %162 = vmatpush1.bf16.msra.mxu0 0
  %163 = vmatprep.subr.bf16.mxu0 0
  %164 = vmatpush1.bf16.msra.mxu0 0
  %165 = vmatprep.subr.bf16.mxu0 0
  %166 = vmatpush1.bf16.msra.mxu0 0
  %167 = vmatprep.subr.bf16.mxu0 0
  %168 = vmatpush1.bf16.msra.mxu0 0
  %169 = vmatprep.mubr.bf16.mxu0 0
  %170 = vmatmul.mubr.bf16.gmra.mrb[0].mxu0 %v135
  %v171 = vpop.f32.mrb[0].mxu0
  %v172 = vadd.f32 %v133, %v171
  %v173 = vpop.f32.mrb[0].mxu0
  %v174 = vpop.f32.mrb[0].mxu0
  %v175 = vadd.f32 %v133, %v174
  %v176 = vpop.f32.mrb[0].mxu0
  %177 = vdwg.mxu0
  %v178 = vpack.c.bf16 %v175, %v172
  %180 = vrot.lane.b32.xlu0 %v178, 96
  %v181 = vpop.permute.xlu0 %180
  %v183 = vsel %vm83, %v178, 0
  %v186 = vsel %vm83, %v181, 0
  %188 = vmatprep.subr.bf16.mxu0 0
  %189 = vmatpush1.bf16.xpose.msra.mxu0 %v186
  %190 = vmatprep.subr.bf16.mxu0 0
  %191 = vmatpush1.bf16.xpose.msra.mxu0 0
  %192 = vmatprep.subr.bf16.mxu0 0
  %193 = vmatpush1.bf16.xpose.msra.mxu0 0
  %194 = vmatprep.subr.bf16.mxu0 0
  %195 = vmatpush1.bf16.xpose.msra.mxu0 0
  %196 = vmatprep.subr.bf16.mxu0 0
  %197 = vmatpush1.bf16.xpose.msra.mxu0 0
  %198 = vmatprep.subr.bf16.mxu0 0
  %199 = vmatpush1.bf16.xpose.msra.mxu0 0
  %200 = vmatprep.subr.bf16.mxu0 0
  %201 = vmatpush1.bf16.xpose.msra.mxu0 0
  %202 = vmatprep.subr.bf16.mxu0 0
  %203 = vmatpush1.bf16.xpose.msra.mxu0 0
  %204 = vmatprep.subr.bf16.mxu0 0
  %205 = vmatpush1.bf16.xpose.msra.mxu0 0
  %206 = vmatprep.subr.bf16.mxu0 0
  %207 = vmatpush1.bf16.xpose.msra.mxu0 0
  %208 = vmatprep.subr.bf16.mxu0 0
  %209 = vmatpush1.bf16.xpose.msra.mxu0 0
  %210 = vmatprep.subr.bf16.mxu0 0
  %211 = vmatpush1.bf16.xpose.msra.mxu0 0
  %212 = vmatprep.subr.bf16.mxu0 0
  %213 = vmatpush1.bf16.xpose.msra.mxu0 0
  %214 = vmatprep.subr.bf16.mxu0 0
  %215 = vmatpush1.bf16.xpose.msra.mxu0 0
  %216 = vmatprep.subr.bf16.mxu0 0
  %217 = vmatpush1.bf16.xpose.msra.mxu0 0
  %218 = vmatprep.subr.bf16.mxu0 0
  %219 = vmatpush1.bf16.xpose.msra.mxu0 0
  %220 = vmatprep.mubr.bf16.mxu0 0
  %221 = vmatmul.mubr.bf16.gmra.mrb[0].mxu0 %v183
  %v222 = vpop.f32.mrb[0].mxu0
  %v223 = vadd.f32 0.0, %v222
  %v224 = vpop.f32.mrb[0].mxu0
  %v225 = vpop.f32.mrb[0].mxu0
  %v226 = vadd.f32 0.0, %v225
  %v227 = vpop.f32.mrb[0].mxu0
  %228 = vdwg.mxu0
  %v229 = vmul.f32 %v223, 0.17677669
  %v230 = vmul.f32 %v226, 0.17677669
  %vm231 = vcmask 130048
  %v232 = vsel %vm231, %v229, -inf
  %233 = vmax.xlane.f32.xlu0 %v232
  %v234 = vpop.xlane.xlu0 %233
  %v235 = vsel %vm231, %v230, -inf
  %236 = vmax.xlane.f32.xlu0 %v235
  %v237 = vpop.xlane.xlu0 %236
  %v238 = vsub.f32 %v229, %v234
  %v239 = vsub.f32 %v230, %v237
  %v240 = vmul.f32 %v238, 1.442695
  %v241 = vpow.pop %v240
  %v242 = vmul.f32 %v239, 1.442695
  %v243 = vpow.pop %v242
  %v244 = vsel %vm231, %v241, 0.0
  %245 = vadd.xlane.f32.xlu0 %v244
  %v246 = vpop.xlane.xlu0 %245
  %v247 = vsel %vm231, %v243, 0.0
  %248 = vadd.xlane.f32.xlu0 %v247
  %v249 = vpop.xlane.xlu0 %248
  %v250 = vrcp.pop %v246
  %v251 = vrcp.pop %v249
  %v252 = vmul.f32 %v241, %v250
  %v253 = vmul.f32 %v243, %v251
  %v254 = vpack.c.bf16 %v253, %v252
  %255 = vrot.lane.b32.xlu0 %v178, 64
  %v256 = vpop.permute.xlu0 %255
  %v259 = vsel %vm231, %v254, 0
  %261 = vmatprep.subr.bf16.mxu0 0
  %262 = vmatpush1.bf16.msra.mxu0 %v256
  %263 = vmatprep.subr.bf16.mxu0 0
  %264 = vmatpush1.bf16.msra.mxu0 0
  %265 = vmatprep.subr.bf16.mxu0 0
  %266 = vmatpush1.bf16.msra.mxu0 0
  %267 = vmatprep.subr.bf16.mxu0 0
  %268 = vmatpush1.bf16.msra.mxu0 0
  %269 = vmatprep.subr.bf16.mxu0 0
  %270 = vmatpush1.bf16.msra.mxu0 0
  %271 = vmatprep.subr.bf16.mxu0 0
  %272 = vmatpush1.bf16.msra.mxu0 0
  %273 = vmatprep.subr.bf16.mxu0 0
  %274 = vmatpush1.bf16.msra.mxu0 0
  %275 = vmatprep.subr.bf16.mxu0 0
  %276 = vmatpush1.bf16.msra.mxu0 0
  %277 = vmatprep.subr.bf16.mxu0 0
  %278 = vmatpush1.bf16.msra.mxu0 0
  %279 = vmatprep.subr.bf16.mxu0 0
  %280 = vmatpush1.bf16.msra.mxu0 0
  %281 = vmatprep.subr.bf16.mxu0 0
  %282 = vmatpush1.bf16.msra.mxu0 0
  %283 = vmatprep.subr.bf16.mxu0 0
  %284 = vmatpush1.bf16.msra.mxu0 0
  %285 = vmatprep.subr.bf16.mxu0 0
  %286 = vmatpush1.bf16.msra.mxu0 0
  %287 = vmatprep.subr.bf16.mxu0 0
  %288 = vmatpush1.bf16.msra.mxu0 0
  %289 = vmatprep.subr.bf16.mxu0 0
  %290 = vmatpush1.bf16.msra.mxu0 0
  %291 = vmatprep.subr.bf16.mxu0 0
  %292 = vmatpush1.bf16.msra.mxu0 0
  %293 = vmatprep.mubr.bf16.mxu0 0
  %294 = vmatmul.mubr.bf16.gmra.mrb[0].mxu0 %v259
  %v295 = vpop.f32.mrb[0].mxu0
  %v296 = vadd.f32 0.0, %v295
  %v297 = vpop.f32.mrb[0].mxu0
  %v298 = vpop.f32.mrb[0].mxu0
  %v299 = vadd.f32 0.0, %v298
  %v300 = vpop.f32.mrb[0].mxu0
  %301 = vdwg.mxu0
  %v302 = vld [vmem:[%s1 + $0x60] sm:$0xff]
  %v303 = vld [vmem:[%s1 + $0x68] sm:$0xff]
  %v304 = vld [vmem:[%s1 + $0x70] sm:$0xff]
  %v305 = vld [vmem:[%s1 + $0x78] sm:$0xff]
  %v306 = vpack.c.bf16 %v299, %v296
  %v307 = vpack.c.bf16 %v303, %v302
  %v308 = vpack.c.bf16 %v305, %v304
  %v310 = vsel %vm83, %v306, 0
  %312 = vmatprep.subr.bf16.mxu0 0
  %313 = vmatpush1.bf16.msra.mxu0 %v307
  %314 = vmatprep.subr.bf16.mxu0 0
  %315 = vmatpush1.bf16.msra.mxu0 %v308
  %316 = vmatprep.subr.bf16.mxu0 0
  %317 = vmatpush1.bf16.msra.mxu0 0
  %318 = vmatprep.subr.bf16.mxu0 0
  %319 = vmatpush1.bf16.msra.mxu0 0
  %320 = vmatprep.subr.bf16.mxu0 0
  %321 = vmatpush1.bf16.msra.mxu0 0
  %322 = vmatprep.subr.bf16.mxu0 0
  %323 = vmatpush1.bf16.msra.mxu0 0
  %324 = vmatprep.subr.bf16.mxu0 0
  %325 = vmatpush1.bf16.msra.mxu0 0
  %326 = vmatprep.subr.bf16.mxu0 0
  %327 = vmatpush1.bf16.msra.mxu0 0
  %328 = vmatprep.subr.bf16.mxu0 0
  %329 = vmatpush1.bf16.msra.mxu0 0
  %330 = vmatprep.subr.bf16.mxu0 0
  %331 = vmatpush1.bf16.msra.mxu0 0
  %332 = vmatprep.subr.bf16.mxu0 0
  %333 = vmatpush1.bf16.msra.mxu0 0
  %334 = vmatprep.subr.bf16.mxu0 0
  %335 = vmatpush1.bf16.msra.mxu0 0
  %336 = vmatprep.subr.bf16.mxu0 0
  %337 = vmatpush1.bf16.msra.mxu0 0
  %338 = vmatprep.subr.bf16.mxu0 0
  %339 = vmatpush1.bf16.msra.mxu0 0
  %340 = vmatprep.subr.bf16.mxu0 0
  %341 = vmatpush1.bf16.msra.mxu0 0
  %342 = vmatprep.subr.bf16.mxu0 0
  %343 = vmatpush1.bf16.msra.mxu0 0
  %344 = vmatprep.mubr.bf16.mxu0 0
  %345 = vmatmul.mubr.bf16.gmra.mrb[0].mxu0 %v310
  %v346 = vpop.f32.mrb[0].mxu0
  %v347 = vadd.f32 0.0, %v346
  %v348 = vpop.f32.mrb[0].mxu0
  %v349 = vpop.f32.mrb[0].mxu0
  %v350 = vadd.f32 0.0, %v349
  %v351 = vpop.f32.mrb[0].mxu0
  %352 = vdwg.mxu0
  %v353 = vadd.f32 %v81, %v347
  %v354 = vadd.f32 %v82, %v350
  %v355 = vlaneseq
  %v356 = vshrl.u32 %v355, 7
  %v357 = vsub.s32 4, %v356
  %v358 = vrot.slane %v15, %v357
  %v359 = vadd.f32 %v353, %v358
  %v360 = vadd.f32 %v354, %v358
  %v361 = vsel %vm83, %v359, 0.0
  %362 = vadd.xlane.f32.xlu0 %v361
  %v363 = vpop.xlane.xlu0 %362
  %v364 = vsel %vm83, %v360, 0.0
  %365 = vadd.xlane.f32.xlu0 %v364
  %v366 = vpop.xlane.xlu0 %365
  %v367 = vmul.f32 %v363, %v90
  %v368 = vmul.f32 %v366, %v90
  %v369 = vsub.f32 %v359, %v367
  %v370 = vsub.f32 %v360, %v368
  %v371 = vmul.f32 %v369, %v369
  %v372 = vmul.f32 %v370, %v370
  %v373 = vsel %vm83, %v371, 0.0
  %374 = vadd.xlane.f32.xlu0 %v373
  %v375 = vpop.xlane.xlu0 %374
  %v376 = vsel %vm83, %v372, 0.0
  %377 = vadd.xlane.f32.xlu0 %v376
  %v378 = vpop.xlane.xlu0 %377
  %v379 = vmul.f32 %v375, %v90
  %v380 = vmul.f32 %v378, %v90
  %v381 = vadd.f32 %v379, 1e-06
  %v382 = vadd.f32 %v380, 1e-06
  %v383 = vrsqrt.pop %v381
  %v384 = vrsqrt.pop %v382
  %v385 = vmul.f32 %v369, %v383
  %v386 = vmul.f32 %v370, %v384
  %v387 = vlaneseq
  %v388 = vshrl.u32 %v387, 7
  %v389 = vsub.s32 5, %v388
  %v390 = vrot.slane %v15, %v389
  %v391 = vmul.f32 %v385, %v390
  %v392 = vmul.f32 %v386, %v390
  %v393 = vlaneseq
  %v394 = vshrl.u32 %v393, 7
  %v395 = vsub.s32 6, %v394
  %v396 = vrot.slane %v15, %v395
  %v397 = vadd.f32 %v391, %v396
  %v398 = vadd.f32 %v392, %v396
  %v399 = vld [vmem:[%s1 + $0x80] sm:$0xff]
  %v400 = vld [vmem:[%s1 + $0x88] sm:$0xff]
  %v401 = vld [vmem:[%s1 + $0x90] sm:$0xff]
  %v402 = vld [vmem:[%s1 + $0x98] sm:$0xff]
  %v403 = vpack.c.bf16 %v398, %v397
  %v404 = vpack.c.bf16 %v400, %v399
  %v405 = vpack.c.bf16 %v402, %v401
  %v406 = vlaneseq
  %v407 = vshrl.u32 %v406, 7
  %v408 = vsub.s32 7, %v407
  %v409 = vrot.slane %v15, %v408
  %v411 = vsel %vm83, %v403, 0
  %413 = vmatprep.subr.bf16.mxu0 0
  %414 = vmatpush1.bf16.msra.mxu0 %v404
  %415 = vmatprep.subr.bf16.mxu0 0
  %416 = vmatpush1.bf16.msra.mxu0 %v405
  %417 = vmatprep.subr.bf16.mxu0 0
  %418 = vmatpush1.bf16.msra.mxu0 0
  %419 = vmatprep.subr.bf16.mxu0 0
  %420 = vmatpush1.bf16.msra.mxu0 0
  %421 = vmatprep.subr.bf16.mxu0 0
  %422 = vmatpush1.bf16.msra.mxu0 0
  %423 = vmatprep.subr.bf16.mxu0 0
  %424 = vmatpush1.bf16.msra.mxu0 0
  %425 = vmatprep.subr.bf16.mxu0 0
  %426 = vmatpush1.bf16.msra.mxu0 0
  %427 = vmatprep.subr.bf16.mxu0 0
  %428 = vmatpush1.bf16.msra.mxu0 0
  %429 = vmatprep.subr.bf16.mxu0 0
  %430 = vmatpush1.bf16.msra.mxu0 0
  %431 = vmatprep.subr.bf16.mxu0 0
  %432 = vmatpush1.bf16.msra.mxu0 0
  %433 = vmatprep.subr.bf16.mxu0 0
  %434 = vmatpush1.bf16.msra.mxu0 0
  %435 = vmatprep.subr.bf16.mxu0 0
  %436 = vmatpush1.bf16.msra.mxu0 0
  %437 = vmatprep.subr.bf16.mxu0 0
  %438 = vmatpush1.bf16.msra.mxu0 0
  %439 = vmatprep.subr.bf16.mxu0 0
  %440 = vmatpush1.bf16.msra.mxu0 0
  %441 = vmatprep.subr.bf16.mxu0 0
  %442 = vmatpush1.bf16.msra.mxu0 0
  %443 = vmatprep.subr.bf16.mxu0 0
  %444 = vmatpush1.bf16.msra.mxu0 0
  %445 = vmatprep.mubr.bf16.mxu0 0
  %446 = vmatmul.mubr.bf16.gmra.mrb[0].mxu0 %v411
  %v447 = vpop.f32.mrb[0].mxu0
  %v448 = vadd.f32 %v409, %v447
  %v449 = vpop.f32.mrb[0].mxu0
  %v450 = vpop.f32.mrb[0].mxu0
  %v451 = vadd.f32 %v409, %v450
  %v452 = vpop.f32.mrb[0].mxu0
  %453 = vdwg.mxu0
  %v454 = vmul.f32 %v448, %v448
  %v455 = vmul.f32 %v451, %v451
  %v456 = vmul.f32 %v448, %v454
  %v457 = vmul.f32 %v451, %v455
  %v458 = vmul.f32 %v456, 0.044715
  %v459 = vmul.f32 %v457, 0.044715
  %v460 = vadd.f32 %v448, %v458
  %v461 = vadd.f32 %v451, %v459
  %v462 = vmul.f32 %v460, 0.7978846
  %v463 = vmul.f32 %v461, 0.7978846
  %v464 = vtanh.pop %v462
  %v465 = vtanh.pop %v463
  %v466 = vadd.f32 %v464, 1.0
  %v467 = vadd.f32 %v465, 1.0
  %v468 = vmul.f32 %v466, 0.5
  %v469 = vmul.f32 %v467, 0.5
  %v470 = vmul.f32 %v448, %v468
  %v471 = vmul.f32 %v451, %v469
  %v472 = vld [vmem:[%s1 + $0xa0] sm:$0xff]
  %v473 = vld [vmem:[%s1 + $0xa8] sm:$0xff]
  %v474 = vld [vmem:[%s1 + $0xb0] sm:$0xff]
  %v475 = vld [vmem:[%s1 + $0xb8] sm:$0xff]
  %v476 = vld [vmem:[%s1 + $0xc0] sm:$0xff]
  %v477 = vld [vmem:[%s1 + $0xc8] sm:$0xff]
  %v478 = vld [vmem:[%s1 + $0xd0] sm:$0xff]
  %v479 = vld [vmem:[%s1 + $0xd8] sm:$0xff]
  %v480 = vpack.c.bf16 %v471, %v470
  %v481 = vpack.c.bf16 %v473, %v472
  %v482 = vpack.c.bf16 %v475, %v474
  %v483 = vpack.c.bf16 %v477, %v476
  %v484 = vpack.c.bf16 %v479, %v478
  %v485 = vlaneseq
  %v486 = vshrl.u32 %v485, 7
  %v487 = vsub.s32 0, %v486
  %v488 = vrot.slane %v16, %v487
  %vm489 = vcmask 523264
  %v491 = vsel %vm489, %v480, 0
  %493 = vmatprep.subr.bf16.mxu0 0
  %494 = vmatpush1.bf16.msra.mxu0 %v481
  %495 = vmatprep.subr.bf16.mxu0 0
  %496 = vmatpush1.bf16.msra.mxu0 %v482
  %497 = vmatprep.subr.bf16.mxu0 0
  %498 = vmatpush1.bf16.msra.mxu0 %v483
  %499 = vmatprep.subr.bf16.mxu0 0
  %500 = vmatpush1.bf16.msra.mxu0 %v484
  %501 = vmatprep.subr.bf16.mxu0 0
  %502 = vmatpush1.bf16.msra.mxu0 0
  %503 = vmatprep.subr.bf16.mxu0 0
  %504 = vmatpush1.bf16.msra.mxu0 0
  %505 = vmatprep.subr.bf16.mxu0 0
  %506 = vmatpush1.bf16.msra.mxu0 0
  %507 = vmatprep.subr.bf16.mxu0 0
  %508 = vmatpush1.bf16.msra.mxu0 0
  %509 = vmatprep.subr.bf16.mxu0 0
  %510 = vmatpush1.bf16.msra.mxu0 0
  %511 = vmatprep.subr.bf16.mxu0 0
  %512 = vmatpush1.bf16.msra.mxu0 0
  %513 = vmatprep.subr.bf16.mxu0 0
  %514 = vmatpush1.bf16.msra.mxu0 0
  %515 = vmatprep.subr.bf16.mxu0 0
  %516 = vmatpush1.bf16.msra.mxu0 0
  %517 = vmatprep.subr.bf16.mxu0 0
  %518 = vmatpush1.bf16.msra.mxu0 0
  %519 = vmatprep.subr.bf16.mxu0 0
  %520 = vmatpush1.bf16.msra.mxu0 0
  %521 = vmatprep.subr.bf16.mxu0 0
  %522 = vmatpush1.bf16.msra.mxu0 0
  %523 = vmatprep.subr.bf16.mxu0 0
  %524 = vmatpush1.bf16.msra.mxu0 0
  %525 = vmatprep.mubr.bf16.mxu0 0
  %526 = vmatmul.mubr.bf16.gmra.mrb[0].mxu0 %v491
  %v527 = vpop.f32.mrb[0].mxu0
  %v528 = vadd.f32 %v488, %v527
  %v529 = vpop.f32.mrb[0].mxu0
  %v530 = vpop.f32.mrb[0].mxu0
  %v531 = vadd.f32 %v488, %v530
  %v532 = vpop.f32.mrb[0].mxu0
  %533 = vdwg.mxu0
  %v534 = vadd.f32 %v359, %v528
  %v535 = vadd.f32 %v360, %v531
  %v536 = vlaneseq
  %v537 = vshrl.u32 %v536, 7
  %v538 = vsub.s32 1, %v537
  %v539 = vrot.slane %v16, %v538
  %v540 = vadd.f32 %v534, %v539
  %v541 = vadd.f32 %v535, %v539
  %v542 = vld [vmem:[%s1 + $0xe0] sm:$0xff]
  %v543 = vld [vmem:[%s1 + $0xe8] sm:$0xff]
  %v544 = vld [vmem:[%s1 + $0xf0] sm:$0xff]
  %v545 = vld [vmem:[%s1 + $0xf8] sm:$0xff]
  %v546 = vpack.c.bf16 %v16, %v16
  %v547 = vpack.c.bf16 %v543, %v542
  %v548 = vpack.c.bf16 %v545, %v544
  %v550 = vrot.slane %v546, 1
  %v552 = vrot.slane %v16, 3
  %v555 = vsel %vm83, %v550, 0
  %557 = vmatprep.subr.bf16.mxu0 0
  %558 = vmatpush1.bf16.msra.mxu0 %v547
  %559 = vmatprep.subr.bf16.mxu0 0
  %560 = vmatpush1.bf16.msra.mxu0 %v548
  %561 = vmatprep.subr.bf16.mxu0 0
  %562 = vmatpush1.bf16.msra.mxu0 0
  %563 = vmatprep.subr.bf16.mxu0 0
  %564 = vmatpush1.bf16.msra.mxu0 0
  %565 = vmatprep.subr.bf16.mxu0 0
  %566 = vmatpush1.bf16.msra.mxu0 0
  %567 = vmatprep.subr.bf16.mxu0 0
  %568 = vmatpush1.bf16.msra.mxu0 0
  %569 = vmatprep.subr.bf16.mxu0 0
  %570 = vmatpush1.bf16.msra.mxu0 0
  %571 = vmatprep.subr.bf16.mxu0 0
  %572 = vmatpush1.bf16.msra.mxu0 0
  %573 = vmatprep.subr.bf16.mxu0 0
  %574 = vmatpush1.bf16.msra.mxu0 0
  %575 = vmatprep.subr.bf16.mxu0 0
  %576 = vmatpush1.bf16.msra.mxu0 0
  %577 = vmatprep.subr.bf16.mxu0 0
  %578 = vmatpush1.bf16.msra.mxu0 0
  %579 = vmatprep.subr.bf16.mxu0 0
  %580 = vmatpush1.bf16.msra.mxu0 0
  %581 = vmatprep.subr.bf16.mxu0 0
  %582 = vmatpush1.bf16.msra.mxu0 0
  %583 = vmatprep.subr.bf16.mxu0 0
  %584 = vmatpush1.bf16.msra.mxu0 0
  %585 = vmatprep.subr.bf16.mxu0 0
  %586 = vmatpush1.bf16.msra.mxu0 0
  %587 = vmatprep.subr.bf16.mxu0 0
  %588 = vmatpush1.bf16.msra.mxu0 0
  %589 = vmatprep.mubr.bf16.mxu0 0
  %590 = vmatmul.mubr.bf16.gmra.mrb[0].mxu0 %v555
  %v591 = vpop.f32.mrb[0].mxu0
  %v592 = vadd.f32 %v552, %v591
  %v593 = vpop.f32.mrb[0].mxu0
  %v594 = vpop.f32.mrb[0].mxu0
  %v595 = vpop.f32.mrb[0].mxu0
  %596 = vdwg.mxu0
  %v597 = vld [vmem:[%s1 + $0x100] sm:$0xff]
  %v598 = vld [vmem:[%s1 + $0x108] sm:$0xff]
  %v599 = vld [vmem:[%s1 + $0x110] sm:$0xff]
  %v600 = vld [vmem:[%s1 + $0x118] sm:$0xff]
  %v601 = vpack.c.bf16 %v541, %v540
  %v602 = vpack.c.bf16 %v598, %v597
  %v603 = vpack.c.bf16 %v600, %v599
  %v604 = vlaneseq
  %v605 = vshrl.u32 %v604, 7
  %v606 = vsub.s32 4, %v605
  %v607 = vrot.slane %v16, %v606
  %v609 = vsel %vm83, %v601, 0
  %611 = vmatprep.subr.bf16.mxu0 0
  %612 = vmatpush1.bf16.msra.mxu0 %v602
  %613 = vmatprep.subr.bf16.mxu0 0
  %614 = vmatpush1.bf16.msra.mxu0 %v603
  %615 = vmatprep.subr.bf16.mxu0 0
  %616 = vmatpush1.bf16.msra.mxu0 0
  %617 = vmatprep.subr.bf16.mxu0 0
  %618 = vmatpush1.bf16.msra.mxu0 0
  %619 = vmatprep.subr.bf16.mxu0 0
  %620 = vmatpush1.bf16.msra.mxu0 0
  %621 = vmatprep.subr.bf16.mxu0 0
  %622 = vmatpush1.bf16.msra.mxu0 0
  %623 = vmatprep.subr.bf16.mxu0 0
  %624 = vmatpush1.bf16.msra.mxu0 0
  %625 = vmatprep.subr.bf16.mxu0 0
  %626 = vmatpush1.bf16.msra.mxu0 0
  %627 = vmatprep.subr.bf16.mxu0 0
  %628 = vmatpush1.bf16.msra.mxu0 0
  %629 = vmatprep.subr.bf16.mxu0 0
  %630 = vmatpush1.bf16.msra.mxu0 0
  %631 = vmatprep.subr.bf16.mxu0 0
  %632 = vmatpush1.bf16.msra.mxu0 0
  %633 = vmatprep.subr.bf16.mxu0 0
  %634 = vmatpush1.bf16.msra.mxu0 0
  %635 = vmatprep.subr.bf16.mxu0 0
  %636 = vmatpush1.bf16.msra.mxu0 0
  %637 = vmatprep.subr.bf16.mxu0 0
  %638 = vmatpush1.bf16.msra.mxu0 0
  %639 = vmatprep.subr.bf16.mxu0 0
  %640 = vmatpush1.bf16.msra.mxu0 0
  %641 = vmatprep.subr.bf16.mxu0 0
  %642 = vmatpush1.bf16.msra.mxu0 0
  %643 = vmatprep.mubr.bf16.mxu0 0
  %644 = vmatmul.mubr.bf16.gmra.mrb[0].mxu0 %v609
  %v645 = vpop.f32.mrb[0].mxu0
  %v646 = vadd.f32 %v607, %v645
  %v647 = vpop.f32.mrb[0].mxu0
  %v648 = vpop.f32.mrb[0].mxu0
  %v649 = vadd.f32 %v607, %v648
  %v650 = vpop.f32.mrb[0].mxu0
  %651 = vdwg.mxu0
  %v652 = vpack.c.bf16 %v592, %v592
  %v653 = vpack.c.bf16 %v649, %v646
  %v655 = vsel %vm83, %v652, 0
  %v658 = vsel %vm83, %v653, 0
  %660 = vmatprep.subr.bf16.mxu0 0
  %661 = vmatpush1.bf16.xpose.msra.mxu0 %v658
  %662 = vmatprep.subr.bf16.mxu0 0
  %663 = vmatpush1.bf16.xpose.msra.mxu0 0
  %664 = vmatprep.subr.bf16.mxu0 0
  %665 = vmatpush1.bf16.xpose.msra.mxu0 0
  %666 = vmatprep.subr.bf16.mxu0 0
  %667 = vmatpush1.bf16.xpose.msra.mxu0 0
  %668 = vmatprep.subr.bf16.mxu0 0
  %669 = vmatpush1.bf16.xpose.msra.mxu0 0
  %670 = vmatprep.subr.bf16.mxu0 0
  %671 = vmatpush1.bf16.xpose.msra.mxu0 0
  %672 = vmatprep.subr.bf16.mxu0 0
  %673 = vmatpush1.bf16.xpose.msra.mxu0 0
  %674 = vmatprep.subr.bf16.mxu0 0
  %675 = vmatpush1.bf16.xpose.msra.mxu0 0
  %676 = vmatprep.subr.bf16.mxu0 0
  %677 = vmatpush1.bf16.xpose.msra.mxu0 0
  %678 = vmatprep.subr.bf16.mxu0 0
  %679 = vmatpush1.bf16.xpose.msra.mxu0 0
  %680 = vmatprep.subr.bf16.mxu0 0
  %681 = vmatpush1.bf16.xpose.msra.mxu0 0
  %682 = vmatprep.subr.bf16.mxu0 0
  %683 = vmatpush1.bf16.xpose.msra.mxu0 0
  %684 = vmatprep.subr.bf16.mxu0 0
  %685 = vmatpush1.bf16.xpose.msra.mxu0 0
  %686 = vmatprep.subr.bf16.mxu0 0
  %687 = vmatpush1.bf16.xpose.msra.mxu0 0
  %688 = vmatprep.subr.bf16.mxu0 0
  %689 = vmatpush1.bf16.xpose.msra.mxu0 0
  %690 = vmatprep.subr.bf16.mxu0 0
  %691 = vmatpush1.bf16.xpose.msra.mxu0 0
  %692 = vmatprep.mubr.bf16.mxu0 0
  %693 = vmatmul.mubr.bf16.gmra.mrb[0].mxu0 %v655
  %v694 = vpop.f32.mrb[0].mxu0
  %v695 = vadd.f32 0.0, %v694
  %v696 = vpop.f32.mrb[0].mxu0
  %v697 = vpop.f32.mrb[0].mxu0
  %v698 = vpop.f32.mrb[0].mxu0
  %699 = vdwg.mxu0
  %v700 = vmul.f32 %v695, 0.17677669
  %vm701 = vcmask 122880
  %v702 = vsel %vm701, %v700, -inf
  %703 = vmax.xlane.f32.xlu0 %v702
  %v704 = vpop.xlane.xlu0 %703
  %v705 = vsub.f32 %v700, %v704
  %v706 = vmul.f32 %v705, 1.442695
  %v707 = vpow.pop %v706
  %v708 = vsel %vm701, %v707, 0.0
  %709 = vadd.xlane.f32.xlu0 %v708
  %v710 = vpop.xlane.xlu0 %709
  %v711 = vrcp.pop %v710
  %v712 = vmul.f32 %v707, %v711
  %v713 = vpack.c.bf16 %v712, %v712
  %715 = vrot.lane.b32.xlu0 %v653, 96
  %v716 = vpop.permute.xlu0 %715
  %v719 = vsel %vm231, %v713, 0
  %721 = vmatprep.subr.bf16.mxu0 0
  %722 = vmatpush1.bf16.msra.mxu0 %v716
  %723 = vmatprep.subr.bf16.mxu0 0
  %724 = vmatpush1.bf16.msra.mxu0 0
  %725 = vmatprep.subr.bf16.mxu0 0
  %726 = vmatpush1.bf16.msra.mxu0 0
  %727 = vmatprep.subr.bf16.mxu0 0
  %728 = vmatpush1.bf16.msra.mxu0 0
  %729 = vmatprep.subr.bf16.mxu0 0
  %730 = vmatpush1.bf16.msra.mxu0 0
  %731 = vmatprep.subr.bf16.mxu0 0
  %732 = vmatpush1.bf16.msra.mxu0 0
  %733 = vmatprep.subr.bf16.mxu0 0
  %734 = vmatpush1.bf16.msra.mxu0 0
  %735 = vmatprep.subr.bf16.mxu0 0
  %736 = vmatpush1.bf16.msra.mxu0 0
  %737 = vmatprep.subr.bf16.mxu0 0
  %738 = vmatpush1.bf16.msra.mxu0 0
  %739 = vmatprep.subr.bf16.mxu0 0
  %740 = vmatpush1.bf16.msra.mxu0 0
  %741 = vmatprep.subr.bf16.mxu0 0
  %742 = vmatpush1.bf16.msra.mxu0 0
  %743 = vmatprep.subr.bf16.mxu0 0
  %744 = vmatpush1.bf16.msra.mxu0 0
  %745 = vmatprep.subr.bf16.mxu0 0
  %746 = vmatpush1.bf16.msra.mxu0 0
  %747 = vmatprep.subr.bf16.mxu0 0
  %748 = vmatpush1.bf16.msra.mxu0 0
  %749 = vmatprep.subr.bf16.mxu0 0
  %750 = vmatpush1.bf16.msra.mxu0 0
  %751 = vmatprep.subr.bf16.mxu0 0
  %752 = vmatpush1.bf16.msra.mxu0 0
  %753 = vmatprep.mubr.bf16.mxu0 0
  %754 = vmatmul.mubr.bf16.gmra.mrb[0].mxu0 %v719
  %v755 = vpop.f32.mrb[0].mxu0
  %v756 = vadd.f32 0.0, %v755
  %v757 = vpop.f32.mrb[0].mxu0
  %v758 = vpop.f32.mrb[0].mxu0
  %v759 = vpop.f32.mrb[0].mxu0
  %760 = vdwg.mxu0
  %v762 = vrot.slane %v756, 6
  %v764 = vadd.f32 %v16, %v762
  %vm765 = vcmask 256002
  %v766 = vsel %vm765, %v764, 0.0
  %767 = vadd.xlane.f32.xlu0 %v766
  %v768 = vpop.xlane.xlu0 %767
  %v769 = vmul.f32 %v768, %v90
  %v770 = vsub.f32 %v764, %v769
  %v771 = vmul.f32 %v770, %v770
  %v772 = vsel %vm765, %v771, 0.0
  %773 = vadd.xlane.f32.xlu0 %v772
  %v774 = vpop.xlane.xlu0 %773
  %v775 = vmul.f32 %v774, %v90
  %v776 = vadd.f32 %v775, 1e-06
  %v777 = vrsqrt.pop %v776
  %v778 = vmul.f32 %v770, %v777
  %v779 = vmul.f32 %v778, %v552
  %v780 = vrot.slane %v16, 4
  %v782 = vadd.f32 %v779, %v780
  %v783 = vld [vmem:[%s1 + $0x120] sm:$0xff]
  %v784 = vld [vmem:[%s1 + $0x128] sm:$0xff]
  %v785 = vld [vmem:[%s1 + $0x130] sm:$0xff]
  %v786 = vld [vmem:[%s1 + $0x138] sm:$0xff]
  %v787 = vpack.c.bf16 %v782, %v782
  %v788 = vpack.c.bf16 %v784, %v783
  %v789 = vpack.c.bf16 %v786, %v785
  %v791 = vrot.slane %v787, 1
  %v792 = vrot.slane %v16, 7
  %v795 = vsel %vm83, %v791, 0
  %797 = vmatprep.subr.bf16.mxu0 0
  %798 = vmatpush1.bf16.msra.mxu0 %v788
  %799 = vmatprep.subr.bf16.mxu0 0
  %800 = vmatpush1.bf16.msra.mxu0 %v789
  %801 = vmatprep.subr.bf16.mxu0 0
  %802 = vmatpush1.bf16.msra.mxu0 0
  %803 = vmatprep.subr.bf16.mxu0 0
  %804 = vmatpush1.bf16.msra.mxu0 0
  %805 = vmatprep.subr.bf16.mxu0 0
  %806 = vmatpush1.bf16.msra.mxu0 0
  %807 = vmatprep.subr.bf16.mxu0 0
  %808 = vmatpush1.bf16.msra.mxu0 0
  %809 = vmatprep.subr.bf16.mxu0 0
  %810 = vmatpush1.bf16.msra.mxu0 0
  %811 = vmatprep.subr.bf16.mxu0 0
  %812 = vmatpush1.bf16.msra.mxu0 0
  %813 = vmatprep.subr.bf16.mxu0 0
  %814 = vmatpush1.bf16.msra.mxu0 0
  %815 = vmatprep.subr.bf16.mxu0 0
  %816 = vmatpush1.bf16.msra.mxu0 0
  %817 = vmatprep.subr.bf16.mxu0 0
  %818 = vmatpush1.bf16.msra.mxu0 0
  %819 = vmatprep.subr.bf16.mxu0 0
  %820 = vmatpush1.bf16.msra.mxu0 0
  %821 = vmatprep.subr.bf16.mxu0 0
  %822 = vmatpush1.bf16.msra.mxu0 0
  %823 = vmatprep.subr.bf16.mxu0 0
  %824 = vmatpush1.bf16.msra.mxu0 0
  %825 = vmatprep.subr.bf16.mxu0 0
  %826 = vmatpush1.bf16.msra.mxu0 0
  %827 = vmatprep.subr.bf16.mxu0 0
  %828 = vmatpush1.bf16.msra.mxu0 0
  %829 = vmatprep.mubr.bf16.mxu0 0
  %830 = vmatmul.mubr.bf16.gmra.mrb[0].mxu0 %v795
  %v831 = vpop.f32.mrb[0].mxu0
  %v832 = vadd.f32 %v792, %v831
  %v833 = vpop.f32.mrb[0].mxu0
  %v834 = vpop.f32.mrb[0].mxu0
  %v835 = vpop.f32.mrb[0].mxu0
  %836 = vdwg.mxu0
  %v837 = vmul.f32 %v832, %v832
  %v838 = vmul.f32 %v832, %v837
  %v839 = vmul.f32 %v838, 0.044715
  %v840 = vadd.f32 %v832, %v839
  %v841 = vmul.f32 %v840, 0.7978846
  %v842 = vtanh.pop %v841
  %v843 = vadd.f32 %v842, 1.0
  %v844 = vmul.f32 %v843, 0.5
  %v845 = vmul.f32 %v832, %v844
  %v846 = vld [vmem:[%s1 + $0x140] sm:$0xff]
  %v847 = vld [vmem:[%s1 + $0x148] sm:$0xff]
  %v848 = vld [vmem:[%s1 + $0x150] sm:$0xff]
  %v849 = vld [vmem:[%s1 + $0x158] sm:$0xff]
  %v850 = vpack.c.bf16 %v845, %v845
  %v851 = vpack.c.bf16 %v847, %v846
  %v852 = vpack.c.bf16 %v849, %v848
  %v854 = vsel %vm83, %v850, 0
  %856 = vmatprep.subr.bf16.mxu0 0
  %857 = vmatpush1.bf16.msra.mxu0 %v851
  %858 = vmatprep.subr.bf16.mxu0 0
  %859 = vmatpush1.bf16.msra.mxu0 %v852
  %860 = vmatprep.subr.bf16.mxu0 0
  %861 = vmatpush1.bf16.msra.mxu0 0
  %862 = vmatprep.subr.bf16.mxu0 0
  %863 = vmatpush1.bf16.msra.mxu0 0
  %864 = vmatprep.subr.bf16.mxu0 0
  %865 = vmatpush1.bf16.msra.mxu0 0
  %866 = vmatprep.subr.bf16.mxu0 0
  %867 = vmatpush1.bf16.msra.mxu0 0
  %868 = vmatprep.subr.bf16.mxu0 0
  %869 = vmatpush1.bf16.msra.mxu0 0
  %870 = vmatprep.subr.bf16.mxu0 0
  %871 = vmatpush1.bf16.msra.mxu0 0
  %872 = vmatprep.subr.bf16.mxu0 0
  %873 = vmatpush1.bf16.msra.mxu0 0
  %874 = vmatprep.subr.bf16.mxu0 0
  %875 = vmatpush1.bf16.msra.mxu0 0
  %876 = vmatprep.subr.bf16.mxu0 0
  %877 = vmatpush1.bf16.msra.mxu0 0
  %878 = vmatprep.subr.bf16.mxu0 0
  %879 = vmatpush1.bf16.msra.mxu0 0
  %880 = vmatprep.subr.bf16.mxu0 0
  %881 = vmatpush1.bf16.msra.mxu0 0
  %882 = vmatprep.subr.bf16.mxu0 0
  %883 = vmatpush1.bf16.msra.mxu0 0
  %884 = vmatprep.subr.bf16.mxu0 0
  %885 = vmatpush1.bf16.msra.mxu0 0
  %886 = vmatprep.subr.bf16.mxu0 0
  %887 = vmatpush1.bf16.msra.mxu0 0
  %888 = vmatprep.mubr.bf16.mxu0 0
  %889 = vmatmul.mubr.bf16.gmra.mrb[0].mxu0 %v854
  %v890 = vpop.f32.mrb[0].mxu0
  %v891 = vadd.f32 %v17, %v890
  %v892 = vpop.f32.mrb[0].mxu0
  %v893 = vpop.f32.mrb[0].mxu0
  %v894 = vpop.f32.mrb[0].mxu0
  %895 = vdwg.mxu0
  %v896 = vld [vmem:[%s1 + $0x160] sm:$0xff]
  %v897 = vld [vmem:[%s1 + $0x168] sm:$0xff]
  %v898 = vld [vmem:[%s1 + $0x170] sm:$0xff]
  %v899 = vld [vmem:[%s1 + $0x178] sm:$0xff]
  %v900 = vlaneseq
  %v901 = vshrl.u32 %v900, 7
  %v902 = vsub.s32 1, %v901
  %v903 = vrot.slane %v17, %v902
  %v905 = vsel %vm83, %v534, 0
  %v908 = vsel %vm83, %v535, 0
  %910 = vmatprep.subr.mxu0 0.0
  %911 = vmatpush1.msra.mxu0 %v896
  %912 = vmatprep.subr.mxu0 0.0
  %913 = vmatpush1.msra.mxu0 %v897
  %914 = vmatprep.subr.mxu0 0.0
  %915 = vmatpush1.msra.mxu0 %v898
  %916 = vmatprep.subr.mxu0 0.0
  %917 = vmatpush1.msra.mxu0 %v899
  %918 = vmatprep.subr.mxu0 0.0
  %919 = vmatpush1.msra.mxu0 0.0
  %920 = vmatprep.subr.mxu0 0.0
  %921 = vmatpush1.msra.mxu0 0.0
  %922 = vmatprep.subr.mxu0 0.0
  %923 = vmatpush1.msra.mxu0 0.0
  %924 = vmatprep.subr.mxu0 0.0
  %925 = vmatpush1.msra.mxu0 0.0
  %926 = vmatprep.subr.mxu0 0.0
  %927 = vmatpush1.msra.mxu0 0.0
  %928 = vmatprep.subr.mxu0 0.0
  %929 = vmatpush1.msra.mxu0 0.0
  %930 = vmatprep.subr.mxu0 0.0
  %931 = vmatpush1.msra.mxu0 0.0
  %932 = vmatprep.subr.mxu0 0.0
  %933 = vmatpush1.msra.mxu0 0.0
  %934 = vmatprep.subr.mxu0 0.0
  %935 = vmatpush1.msra.mxu0 0.0
  %936 = vmatprep.subr.mxu0 0.0
  %937 = vmatpush1.msra.mxu0 0.0
  %938 = vmatprep.subr.mxu0 0.0
  %939 = vmatpush1.msra.mxu0 0.0
  %940 = vmatprep.subr.mxu0 0.0
  %941 = vmatpush1.msra.mxu0 0.0
  %942 = vmatprep.subr.mxu0 0.0
  %943 = vmatpush1.msra.mxu0 0.0
  %944 = vmatprep.subr.mxu0 0.0
  %945 = vmatpush1.msra.mxu0 0.0
  %946 = vmatprep.subr.mxu0 0.0
  %947 = vmatpush1.msra.mxu0 0.0
  %948 = vmatprep.subr.mxu0 0.0
  %949 = vmatpush1.msra.mxu0 0.0
  %950 = vmatprep.subr.mxu0 0.0
  %951 = vmatpush1.msra.mxu0 0.0
  %952 = vmatprep.subr.mxu0 0.0
  %953 = vmatpush1.msra.mxu0 0.0
  %954 = vmatprep.subr.mxu0 0.0
  %955 = vmatpush1.msra.mxu0 0.0
  %956 = vmatprep.subr.mxu0 0.0
  %957 = vmatpush1.msra.mxu0 0.0
  %958 = vmatprep.subr.mxu0 0.0
  %959 = vmatpush1.msra.mxu0 0.0
  %960 = vmatprep.subr.mxu0 0.0
  %961 = vmatpush1.msra.mxu0 0.0
  %962 = vmatprep.subr.mxu0 0.0
  %963 = vmatpush1.msra.mxu0 0.0
  %964 = vmatprep.subr.mxu0 0.0
  %965 = vmatpush1.msra.mxu0 0.0
  %966 = vmatprep.subr.mxu0 0.0
  %967 = vmatpush1.msra.mxu0 0.0
  %968 = vmatprep.subr.mxu0 0.0
  %969 = vmatpush1.msra.mxu0 0.0
  %970 = vmatprep.subr.mxu0 0.0
  %971 = vmatpush1.msra.mxu0 0.0
  %972 = vmatprep.subr.mxu0 0.0
  %973 = vmatpush1.msra.mxu0 0.0
  %974 = vmatprep.mubr.f32.mxu0 0.0
  %975 = vmatmul.mubr.f32.gmra.mrb[0].mxu0 %v905
  %v976 = vpop.f32.mrb[0].mxu0
  %v977 = vadd.f32 %v903, %v976
  %v978 = vpop.f32.mrb[0].mxu0
  %979 = vmatprep.mubr.f32.mxu0 0.0
  %980 = vmatmul.mubr.f32.gmra.mrb[0].mxu0 %v908
  %v981 = vpop.f32.mrb[0].mxu0
  %v982 = vadd.f32 %v903, %v981
  %v983 = vpop.f32.mrb[0].mxu0
  %984 = vdwg.mxu0
  %v985 = vld [vmem:[%s1 + $0x180] sm:$0xff]
  %vm986 = vcmask 64512
  %v988 = vsel %vm986, %v891, 0
  %990 = vmatprep.subr.mxu0 0.0
  %991 = vmatpush1.msra.mxu0 %v985
  %992 = vmatprep.subr.mxu0 0.0
  %993 = vmatpush1.msra.mxu0 0.0
  %994 = vmatprep.subr.mxu0 0.0
  %995 = vmatpush1.msra.mxu0 0.0
  %996 = vmatprep.subr.mxu0 0.0
  %997 = vmatpush1.msra.mxu0 0.0
  %998 = vmatprep.subr.mxu0 0.0
  %999 = vmatpush1.msra.mxu0 0.0
  %1000 = vmatprep.subr.mxu0 0.0
  %1001 = vmatpush1.msra.mxu0 0.0
  %1002 = vmatprep.subr.mxu0 0.0
  %1003 = vmatpush1.msra.mxu0 0.0
  %1004 = vmatprep.subr.mxu0 0.0
  %1005 = vmatpush1.msra.mxu0 0.0
  %1006 = vmatprep.subr.mxu0 0.0
  %1007 = vmatpush1.msra.mxu0 0.0
  %1008 = vmatprep.subr.mxu0 0.0
  %1009 = vmatpush1.msra.mxu0 0.0
  %1010 = vmatprep.subr.mxu0 0.0
  %1011 = vmatpush1.msra.mxu0 0.0
  %1012 = vmatprep.subr.mxu0 0.0
  %1013 = vmatpush1.msra.mxu0 0.0
  %1014 = vmatprep.subr.mxu0 0.0
  %1015 = vmatpush1.msra.mxu0 0.0
  %1016 = vmatprep.subr.mxu0 0.0
  %1017 = vmatpush1.msra.mxu0 0.0
  %1018 = vmatprep.subr.mxu0 0.0
  %1019 = vmatpush1.msra.mxu0 0.0
  %1020 = vmatprep.subr.mxu0 0.0
  %1021 = vmatpush1.msra.mxu0 0.0
  %1022 = vmatprep.subr.mxu0 0.0
  %1023 = vmatpush1.msra.mxu0 0.0
  %1024 = vmatprep.subr.mxu0 0.0
  %1025 = vmatpush1.msra.mxu0 0.0
  %1026 = vmatprep.subr.mxu0 0.0
  %1027 = vmatpush1.msra.mxu0 0.0
  %1028 = vmatprep.subr.mxu0 0.0
  %1029 = vmatpush1.msra.mxu0 0.0
  %1030 = vmatprep.subr.mxu0 0.0
  %1031 = vmatpush1.msra.mxu0 0.0
  %1032 = vmatprep.subr.mxu0 0.0
  %1033 = vmatpush1.msra.mxu0 0.0
  %1034 = vmatprep.subr.mxu0 0.0
  %1035 = vmatpush1.msra.mxu0 0.0
  %1036 = vmatprep.subr.mxu0 0.0
  %1037 = vmatpush1.msra.mxu0 0.0
  %1038 = vmatprep.subr.mxu0 0.0
  %1039 = vmatpush1.msra.mxu0 0.0
  %1040 = vmatprep.subr.mxu0 0.0
  %1041 = vmatpush1.msra.mxu0 0.0
  %1042 = vmatprep.subr.mxu0 0.0
  %1043 = vmatpush1.msra.mxu0 0.0
  %1044 = vmatprep.subr.mxu0 0.0
  %1045 = vmatpush1.msra.mxu0 0.0
  %1046 = vmatprep.subr.mxu0 0.0
  %1047 = vmatpush1.msra.mxu0 0.0
  %1048 = vmatprep.subr.mxu0 0.0
  %1049 = vmatpush1.msra.mxu0 0.0
  %1050 = vmatprep.subr.mxu0 0.0
  %1051 = vmatpush1.msra.mxu0 0.0
  %1052 = vmatprep.subr.mxu0 0.0
  %1053 = vmatpush1.msra.mxu0 0.0
  %1054 = vmatprep.mubr.f32.mxu0 0.0
  %1055 = vmatmul.mubr.f32.gmra.mrb[0].mxu0 %v988
  %v1056 = vpop.f32.mrb[0].mxu0
  %v1057 = vadd.f32 0.0, %v1056
  %v1058 = vpop.f32.mrb[0].mxu0
  %1059 = vdwg.mxu0
  %v1060 = vlaneseq
  %v1061 = vshrl.u32 %v1060, 7
  %v1062 = vsub.s32 0, %v1061
  %v1063 = vrot.slane %v1057, %v1062
  %v1064 = vmul.f32 %v977, %v1063
  %v1065 = vmul.f32 %v982, %v1063
  %v1066 = vld [vmem:[%s1 + $0x188] sm:$0xff]
  %v1067 = vld [vmem:[%s1 + $0x190] sm:$0xff]
  %1068 = vmatprep.subr.mxu0 0.0
  %1069 = vmatpush1.xpose.msra.mxu0 %v1066
  %1070 = vmatprep.subr.mxu0 0.0
  %1071 = vmatpush1.xpose.msra.mxu0 %v1067
  %1072 = vmatprep.subr.mxu0 0.0
  %1073 = vmatpush1.xpose.msra.mxu0 0.0
  %1074 = vmatprep.subr.mxu0 0.0
  %1075 = vmatpush1.xpose.msra.mxu0 0.0
  %1076 = vmatprep.subr.mxu0 0.0
  %1077 = vmatpush1.xpose.msra.mxu0 0.0
  %1078 = vmatprep.subr.mxu0 0.0
  %1079 = vmatpush1.xpose.msra.mxu0 0.0
  %1080 = vmatprep.subr.mxu0 0.0
  %1081 = vmatpush1.xpose.msra.mxu0 0.0
  %1082 = vmatprep.subr.mxu0 0.0
  %1083 = vmatpush1.xpose.msra.mxu0 0.0
  %1084 = vmatprep.subr.mxu0 0.0
  %1085 = vmatpush1.xpose.msra.mxu0 0.0
  %1086 = vmatprep.subr.mxu0 0.0
  %1087 = vmatpush1.xpose.msra.mxu0 0.0
  %1088 = vmatprep.subr.mxu0 0.0
  %1089 = vmatpush1.xpose.msra.mxu0 0.0
  %1090 = vmatprep.subr.mxu0 0.0
  %1091 = vmatpush1.xpose.msra.mxu0 0.0
  %1092 = vmatprep.subr.mxu0 0.0
  %1093 = vmatpush1.xpose.msra.mxu0 0.0
  %1094 = vmatprep.subr.mxu0 0.0
  %1095 = vmatpush1.xpose.msra.mxu0 0.0
  %1096 = vmatprep.subr.mxu0 0.0
  %1097 = vmatpush1.xpose.msra.mxu0 0.0
  %1098 = vmatprep.subr.mxu0 0.0
  %1099 = vmatpush1.xpose.msra.mxu0 0.0
  %1100 = vmatprep.subr.mxu0 0.0
  %1101 = vmatpush1.xpose.msra.mxu0 0.0
  %1102 = vmatprep.subr.mxu0 0.0
  %1103 = vmatpush1.xpose.msra.mxu0 0.0
  %1104 = vmatprep.subr.mxu0 0.0
  %1105 = vmatpush1.xpose.msra.mxu0 0.0
  %1106 = vmatprep.subr.mxu0 0.0
  %1107 = vmatpush1.xpose.msra.mxu0 0.0
  %1108 = vmatprep.subr.mxu0 0.0
  %1109 = vmatpush1.xpose.msra.mxu0 0.0
  %1110 = vmatprep.subr.mxu0 0.0
  %1111 = vmatpush1.xpose.msra.mxu0 0.0
  %1112 = vmatprep.subr.mxu0 0.0
  %1113 = vmatpush1.xpose.msra.mxu0 0.0
  %1114 = vmatprep.subr.mxu0 0.0
  %1115 = vmatpush1.xpose.msra.mxu0 0.0
  %1116 = vmatprep.subr.mxu0 0.0
  %1117 = vmatpush1.xpose.msra.mxu0 0.0
  %1118 = vmatprep.subr.mxu0 0.0
  %1119 = vmatpush1.xpose.msra.mxu0 0.0
  %1120 = vmatprep.subr.mxu0 0.0
  %1121 = vmatpush1.xpose.msra.mxu0 0.0
  %1122 = vmatprep.subr.mxu0 0.0
  %1123 = vmatpush1.xpose.msra.mxu0 0.0
  %1124 = vmatprep.subr.mxu0 0.0
  %1125 = vmatpush1.xpose.msra.mxu0 0.0
  %1126 = vmatprep.subr.mxu0 0.0
  %1127 = vmatpush1.xpose.msra.mxu0 0.0
  %1128 = vmatprep.subr.mxu0 0.0
  %1129 = vmatpush1.xpose.msra.mxu0 0.0
  %1130 = vmatprep.subr.mxu0 0.0
  %1131 = vmatpush1.xpose.msra.mxu0 0.0
  %1132 = vmatprep.mubr.f32.mxu0 0.0
  %1133 = vmatmul.mubr.f32.gmra.mrb[0].mxu0 %v1064
  %v1134 = vpop.f32.mrb[0].mxu0
  %v1135 = vadd.f32 0.0, %v1134
  %v1136 = vpop.f32.mrb[0].mxu0
  %1137 = vmatprep.mubr.f32.mxu0 0.0
  %1138 = vmatmul.mubr.f32.gmra.mrb[0].mxu0 %v1065
  %v1139 = vpop.f32.mrb[0].mxu0
  %v1140 = vadd.f32 0.0, %v1139
  %v1141 = vpop.f32.mrb[0].mxu0
  %1142 = vdwg.mxu0
  %vm1143 = vcmp.gt.f32.partialorder %v1135, 1.734601
  %vm1144 = vcmp.gt.f32.partialorder %v1140, 1.734601
  %v1145 = vsel %vm1143, 1, 0
  %v1146 = vsel %vm1144, 1, 0
  %v1147 = vmul.u32 %v1145, 255
  %v1148 = vmul.u32 %v1146, 255
  %1149 = vst.msk [vmem:[%s3] sm:$0xff] %vm231, %v1147
  %1150 = vst.msk [vmem:[%s3 + $0x8] sm:$0xff] %vm231, %v1148
  // Predicated region
  $region14: #{medsam_forward.1} parent=0 // pred_check
    _
  $region15: #{medsam_forward.1} parent=0 // pred_check_branch
    %1152 = sbr.rel (0) target = $region17
  $region16: #{medsam_forward.1} parent=0 // pred_region
    _
  $region17: #{medsam_forward.1} parent=0 // pred_fallthru
    _
  // Predicated region
  $region18: #{medsam_forward.1} parent=0 // pred_check
    _
  $region19: #{medsam_forward.1} parent=0 // pred_check_branch
    %1154 = sbr.rel (0) target = $region21
  $region20: #{medsam_forward.1} parent=0 // pred_region
    _
  $region21: #{medsam_forward.1} parent=0 // pred_fallthru
    _

</llo_original>
